<compile_context>
chip_gen: v6e
topology: v6e:2x2x1
jax: 0.10.0
libtpu: 0.0.40
codegen_flags: <defaults>
</compile_context>

<pallas_src>
import functools

import jax
import jax.numpy as jnp
import numpy as np
from jax import lax
from jax.experimental import pallas as pl
from jax.experimental.pallas import tpu as pltpu

BN_EPS = 1e-5
NC_PAD = 128   # lane-dense padded logits width (num_classes padded to 128)
C_PAD = 128    # padded channel width for every conv1d activation


def _conv_bn_relu(h, prev_mask, next_mask, w_ref, b_ref):
    """Conv1d(k=3,'same') + folded BatchNorm1d(eval) + ReLU on a flat (R, 128) tile.

    h:         (R, 128) f32 activations, R = B*T flattened frames (channels on lanes)
    prev_mask: (R, 128) f32 0/1 -- zero on the first frame of each sample
    next_mask: (R, 128) f32 0/1 -- zero on the last frame of each sample
    w_ref:     (3*128, 128) bf16 -- taps [t-1; t; t+1] stacked along K, BN scale folded in
    b_ref:     (1, 128) f32 -- beta + scale * (conv_bias - running_mean)
    """
    R = h.shape[0]
    h_prev = pltpu.roll(h, shift=1, axis=0) * prev_mask        # h[t-1], zeroed at sample start
    h_next = pltpu.roll(h, shift=R - 1, axis=0) * next_mask    # h[t+1], zeroed at sample end
    h_cat = jnp.concatenate([h_prev, h, h_next], axis=1).astype(jnp.bfloat16)   # (R, 384)
    y = jnp.dot(h_cat, w_ref[...], preferred_element_type=jnp.float32)
    return jnp.maximum(y + b_ref[...], 0.0)                    # (R, 128) f32


def _road_head_kernel(x_ref,
                      w0_ref, b0_ref, w1_ref, b1_ref,
                      w2_ref, b2_ref, w3_ref, b3_ref,
                      wfc_ref, bfc_ref, out_ref, *scratch, im_per_sample):
    T = im_per_sample
    x = x_ref[...]                                   # (R, C5) f32
    R, c5 = x.shape
    B = R // T
    if c5 < C_PAD:                                   # lane-pad backbone features to 128
        x = jnp.concatenate([x, jnp.zeros((R, C_PAD - c5), x.dtype)], axis=1)

    # Per-sample halo masks, built once per step at full lane width and reused
    # by all four conv layers (JAX does not CSE broadcast_in_dim).
    frame = lax.broadcasted_iota(jnp.int32, (R, C_PAD), 0) % T
    prev_mask = (frame > 0).astype(jnp.float32)
    next_mask = (frame < T - 1).astype(jnp.float32)

    h = _conv_bn_relu(x, prev_mask, next_mask, w0_ref, b0_ref)   # conv1d_0: C5  -> 64 (pad 128)
    h = _conv_bn_relu(h, prev_mask, next_mask, w1_ref, b1_ref)   # conv1d_1: 64  -> 64 (pad 128)
    h = _conv_bn_relu(h, prev_mask, next_mask, w2_ref, b2_ref)   # conv1d_2: 64  -> 128
    h = _conv_bn_relu(h, prev_mask, next_mask, w3_ref, b3_ref)   # conv1d_3: 128 -> 128

    # forward_classifier: mean over T as an in-block segmented sum (1/T is
    # folded into wfc), then Linear.
    if T % 8 == 0:
        feat = jnp.sum(h.reshape(B, T, C_PAD), axis=1)           # layout-trivial reshape
    else:
        h_buf = scratch[0]                                       # (R, 128) f32 VMEM staging
        h_buf[...] = h
        feat = jnp.zeros((B, C_PAD), jnp.float32)
        for t_idx in range(T):                                   # static unroll, T is small
            feat = feat + h_buf[pl.ds(t_idx, B, stride=T), :]
    logits = jnp.dot(feat.astype(jnp.bfloat16), wfc_ref[...],
                     preferred_element_type=jnp.float32) + bfc_ref[...]
    out_ref[...] = logits                                        # (B, NC_PAD) f32


def _choose_block(n_samples, T, target_rows):
    """Samples-per-step B, padded sample count and grid length.

    grid == 1 only for small batches (block == full array, any B legal);
    otherwise B is a multiple of 8 (so the (B*T, C) / (B, 128) blocks satisfy
    the (8,128) tiling constraint) and the grid is >= 2 and even so both v7x
    TensorCores get work (the extra step costs ~0.35us on v5e/v6e).
    """
    if n_samples < 16:
        return n_samples, n_samples, 1
    n_blocks = max(2, pl.cdiv(n_samples * T, target_rows))
    if n_blocks % 2:
        n_blocks += 1
    B = pl.cdiv(pl.cdiv(n_samples, n_blocks), 8) * 8
    n_blocks = max(2, pl.cdiv(n_samples, B))
    if n_blocks % 2:
        n_blocks += 1
    return B, B * n_blocks, n_blocks


def road_cnn_head(x_frames, kparams, *, im_per_sample, num_classes, target_rows=4096):
    N, C5 = x_frames.shape
    assert N % im_per_sample == 0, "Batch size is not a multiple of sequence length."
    assert C5 <= C_PAD, "backbone feature width must fit one 128-lane tile"
    T = im_per_sample
    n_samples = N // T
    B, n_pad, grid = _choose_block(n_samples, T, target_rows)

    x = x_frames                                   # keep f32; cast happens inside the kernel
    if n_pad != n_samples:
        x = jnp.concatenate(
            [x, jnp.zeros(((n_pad - n_samples) * T, C5), x.dtype)], axis=0)

    flat_params = [kparams[k] for k in (
        "w0", "b0", "w1", "b1", "w2", "b2", "w3", "b3", "wfc", "bfc")]

    in_specs = [pl.BlockSpec((B * T, C5), lambda i: (i, 0))]
    for p in flat_params:      # small constant params: whole array resident each step
        in_specs.append(pl.BlockSpec(p.shape, lambda i, nd=p.ndim: (0,) * nd))

    scratch_shapes = []
    if T % 8 != 0:             # VMEM staging buffer for the strided segmented sum
        scratch_shapes.append(pltpu.VMEM((B * T, C_PAD), jnp.float32))

    # Advisory cost so XLA can overlap this head with the upstream 2D backbone.
    conv_flops = 2 * n_pad * T * 4 * (3 * C_PAD) * C_PAD
    fc_flops = 2 * n_pad * C_PAD * NC_PAD
    param_bytes = sum(int(np.prod(p.shape)) * p.dtype.itemsize for p in flat_params)
    bytes_accessed = n_pad * T * C5 * 4 + param_bytes + n_pad * NC_PAD * 4
    cost = pl.CostEstimate(flops=int(conv_flops + fc_flops), transcendentals=0,
                           bytes_accessed=int(bytes_accessed))

    out = pl.pallas_call(
        functools.partial(_road_head_kernel, im_per_sample=T),
        out_shape=jax.ShapeDtypeStruct((n_pad, NC_PAD), jnp.float32),
        grid_spec=pltpu.PrefetchScalarGridSpec(
            num_scalar_prefetch=0,
            grid=(grid,),
            in_specs=in_specs,
            out_specs=pl.BlockSpec((B, NC_PAD), lambda i: (i, 0)),
            scratch_shapes=scratch_shapes,
        ),
        compiler_params=pltpu.CompilerParams(
            dimension_semantics=("parallel",),
            # ~20 MiB peak at 4096-row blocks (masks + activations + pipeline
            # buffers + small params); kept <= 32 MiB so the same block size
            # also fits v7x's 64 MiB VMEM.
            vmem_limit_bytes=32 * 1024 * 1024),
        cost_estimate=cost,
    )(x, *flat_params)
    return out[:n_samples, :num_classes]


# ---------------- parameter construction (plain-JAX glue) ----------------

def init_raw_params(key, c5, num_classes):
    """Deterministic synthetic parameters matching the module's shapes."""
    chans = [(c5, 64), (64, 64), (64, 128), (128, 128)]  # conv1d_0..3
    raw = []
    for i, (cin, cout) in enumerate(chans):
        k = jax.random.fold_in(key, i)
        kw, kb, kg, kbe, km, kv = jax.random.split(k, 6)
        raw.append(dict(
            W=jax.random.normal(kw, (cout, cin, 3), jnp.float32) * 0.05,
            b=jax.random.normal(kb, (cout,), jnp.float32) * 0.05,
            gamma=1.0 + 0.1 * jax.random.normal(kg, (cout,), jnp.float32),
            beta=0.1 * jax.random.normal(kbe, (cout,), jnp.float32),
            mean=0.1 * jax.random.normal(km, (cout,), jnp.float32),
            var=jax.random.uniform(kv, (cout,), jnp.float32, minval=0.5, maxval=1.5),
        ))
    kfc = jax.random.fold_in(key, 100)
    kw, kb = jax.random.split(kfc)
    fc = dict(W=jax.random.normal(kw, (num_classes, 128), jnp.float32) * 0.05,
              b=jax.random.normal(kb, (num_classes,), jnp.float32) * 0.05)
    return raw, fc


def fold_params(raw, fc, num_classes, im_per_sample):
    """Fold conv bias + BatchNorm1d(eval) into the tap weights (scale) and a
    per-channel shift; stack taps along K; zero-pad all channel dims to 128
    lanes; fold the 1/T temporal-mean factor into the classifier weight."""
    kp = {}
    for i, p in enumerate(raw):
        cout, cin, _ = p["W"].shape
        assert cin <= C_PAD and cout <= C_PAD
        scale = p["gamma"] / jnp.sqrt(p["var"] + BN_EPS)
        shift = p["beta"] + scale * (p["b"] - p["mean"])
        w = p["W"] * scale[:, None, None]                 # BN scale folded into the taps
        taps = []
        for k in range(3):
            wk = jnp.zeros((C_PAD, C_PAD), jnp.float32)
            wk = wk.at[:cin, :cout].set(w[:, :, k].T)     # (C_in_pad, C_out_pad)
            taps.append(wk)
        kp[f"w{i}"] = jnp.concatenate(taps, axis=0).astype(jnp.bfloat16)   # (3*128, 128)
        kp[f"b{i}"] = jnp.zeros((1, C_PAD), jnp.float32).at[0, :cout].set(shift)
    d_fc = fc["W"].shape[1]
    wfc = jnp.zeros((C_PAD, NC_PAD), jnp.float32)
    wfc = wfc.at[:d_fc, :num_classes].set(jnp.transpose(fc["W"]) / im_per_sample)
    kp["wfc"] = wfc.astype(jnp.bfloat16)
    kp["bfc"] = jnp.zeros((1, NC_PAD), jnp.float32).at[0, :num_classes].set(fc["b"])
    return kp


def ref_forward(x_frames, raw, fc, im_per_sample):
    """Pure-JAX f32 reference mirroring PyTorch forward_stage1/2 + classifier (NCT)."""
    N, C5 = x_frames.shape
    n = N // im_per_sample
    x = x_frames.reshape(n, im_per_sample, C5).transpose(0, 2, 1)  # (n, C, T)
    for p in raw:
        x = lax.conv_general_dilated(
            x, p["W"], window_strides=(1,), padding=[(1, 1)],
            dimension_numbers=("NCH", "OIH", "NCH"))
        x = x + p["b"][None, :, None]
        x = (x - p["mean"][None, :, None]) / jnp.sqrt(p["var"][None, :, None] + BN_EPS)
        x = x * p["gamma"][None, :, None] + p["beta"][None, :, None]
        x = jnp.maximum(x, 0.0)
    feat = x.mean(-1)                                              # (n, 128)
    return feat @ fc["W"].T + fc["b"]


if __name__ == "__main__":
    stages_repeats = [2, 2, 2]                 # only used by the 2D backbone (see TODO)
    stages_out_channels = [8, 16, 32, 64, 64]  # last entry feeds conv1d_0
    num_classes = 7
    im_per_sample = 8                          # small shapes (module default is 25)
    n_samples = 2
    c5 = stages_out_channels[-1]

    key = jax.random.PRNGKey(0)
    kx, kp = jax.random.split(key)

    # TODO(synk): forward_features (conv1/maxpool/stage2-4/local/modulator/conv5 +
    # spatial mean) depends on InvertedResidual / LocalFeatureExtractor / Modulator,
    # whose definitions are not provided; the kernel consumes the per-frame feature
    # vectors that forward_features would produce, shape (N, stages_out_channels[-1]).
    x_frames = jax.random.normal(kx, (n_samples * im_per_sample, c5), jnp.float32)

    raw, fc = init_raw_params(kp, c5, num_classes)
    kparams = fold_params(raw, fc, num_classes, im_per_sample)

    out = road_cnn_head(x_frames, kparams,
                        im_per_sample=im_per_sample, num_classes=num_classes)
    out = jax.block_until_ready(out)

    ref = ref_forward(x_frames, raw, fc, im_per_sample)
    # bf16 matmul operands (BN scale folded into bf16 weights) -> loose tolerance.
    np.testing.assert_allclose(np.asarray(out), np.asarray(ref), rtol=2e-2, atol=2e-2)
    print("KERNEL_OK")
</pallas_src>

<mosaic_0001>
module attributes {stable_mosaic.version = 11 : i64} {
  func.func @_road_head_kernel(%arg0: i32, %arg1: memref<16x64xf32, #tpu.memory_space<vmem>>, %arg2: memref<384x128xbf16, #tpu.memory_space<vmem>>, %arg3: memref<1x128xf32, #tpu.memory_space<vmem>>, %arg4: memref<384x128xbf16, #tpu.memory_space<vmem>>, %arg5: memref<1x128xf32, #tpu.memory_space<vmem>>, %arg6: memref<384x128xbf16, #tpu.memory_space<vmem>>, %arg7: memref<1x128xf32, #tpu.memory_space<vmem>>, %arg8: memref<384x128xbf16, #tpu.memory_space<vmem>>, %arg9: memref<1x128xf32, #tpu.memory_space<vmem>>, %arg10: memref<128x128xbf16, #tpu.memory_space<vmem>>, %arg11: memref<1x128xf32, #tpu.memory_space<vmem>>, %arg12: memref<2x128xf32, #tpu.memory_space<vmem>>) attributes {dimension_semantics = [#tpu.dimension_semantics<parallel>], iteration_bounds = array<i64: 1>, scalar_prefetch = 0 : i64, scratch_operands = 0 : i64, tpu.core_type = #tpu.core_type<tc>, window_params = [{transform_indices = @transform_0, window_bounds = array<i64: 16, 64>}, {pipeline_mode = #tpu.pipeline_mode<synchronous>, transform_indices = @transform_1, window_bounds = array<i64: 384, 128>}, {pipeline_mode = #tpu.pipeline_mode<synchronous>, transform_indices = @transform_2, window_bounds = array<i64: 1, 128>}, {pipeline_mode = #tpu.pipeline_mode<synchronous>, transform_indices = @transform_3, window_bounds = array<i64: 384, 128>}, {pipeline_mode = #tpu.pipeline_mode<synchronous>, transform_indices = @transform_4, window_bounds = array<i64: 1, 128>}, {pipeline_mode = #tpu.pipeline_mode<synchronous>, transform_indices = @transform_5, window_bounds = array<i64: 384, 128>}, {pipeline_mode = #tpu.pipeline_mode<synchronous>, transform_indices = @transform_6, window_bounds = array<i64: 1, 128>}, {pipeline_mode = #tpu.pipeline_mode<synchronous>, transform_indices = @transform_7, window_bounds = array<i64: 384, 128>}, {pipeline_mode = #tpu.pipeline_mode<synchronous>, transform_indices = @transform_8, window_bounds = array<i64: 1, 128>}, {pipeline_mode = #tpu.pipeline_mode<synchronous>, transform_indices = @transform_9, window_bounds = array<i64: 128, 128>}, {pipeline_mode = #tpu.pipeline_mode<synchronous>, transform_indices = @transform_10, window_bounds = array<i64: 1, 128>}, {transform_indices = @transform_11, window_bounds = array<i64: 2, 128>}]} {
    %c0 = arith.constant 0 : index
    %c0_0 = arith.constant 0 : index
    %0 = vector.load %arg1[%c0, %c0_0] : memref<16x64xf32, #tpu.memory_space<vmem>>, vector<16x64xf32>
    %cst = arith.constant 0.000000e+00 : f32
    %1 = vector.broadcast %cst : f32 to vector<16x64xf32>
    %2 = tpu.concatenate %0, %1 in 1 : vector<16x64xf32>, vector<16x64xf32> -> vector<16x128xf32>
    %3 = tpu.iota {dimensions = array<i32: 0>} : vector<16x128xi32>
    %c8_i32 = arith.constant 8 : i32
    %c0_i32 = arith.constant 0 : i32
    %4 = arith.cmpi eq, %c8_i32, %c0_i32 : i32
    %c1_i32 = arith.constant 1 : i32
    %5 = arith.select %4, %c1_i32, %c8_i32 : i32
    %6 = vector.broadcast %5 : i32 to vector<16x128xi32>
    %7 = arith.remsi %3, %6 : vector<16x128xi32>
    %c0_i32_1 = arith.constant 0 : i32
    %8 = vector.broadcast %c0_i32_1 : i32 to vector<16x128xi32>
    %9 = arith.cmpi ne, %7, %8 : vector<16x128xi32>
    %c0_i32_2 = arith.constant 0 : i32
    %10 = vector.broadcast %c0_i32_2 : i32 to vector<16x128xi32>
    %11 = arith.cmpi slt, %7, %10 : vector<16x128xi32>
    %c0_i32_3 = arith.constant 0 : i32
    %12 = arith.cmpi slt, %5, %c0_i32_3 : i32
    %13 = vector.broadcast %12 : i1 to vector<16x128xi1>
    %14 = vector.broadcast %13 : vector<16x128xi1> to vector<16x128xi1>
    %15 = arith.xori %11, %14 : vector<16x128xi1>
    %16 = arith.andi %15, %9 : vector<16x128xi1>
    %17 = vector.broadcast %5 : i32 to vector<16x128xi32>
    %18 = arith.addi %7, %17 : vector<16x128xi32>
    %19 = arith.select %16, %18, %7 : vector<16x128xi1>, vector<16x128xi32>
    %c0_i32_4 = arith.constant 0 : i32
    %20 = vector.broadcast %c0_i32_4 : i32 to vector<16x128xi32>
    %21 = arith.cmpi sgt, %19, %20 : vector<16x128xi32>
    %22 = arith.extui %21 : vector<16x128xi1> to vector<16x128xi32>
    %23 = arith.sitofp %22 : vector<16x128xi32> to vector<16x128xf32>
    %c7_i32 = arith.constant 7 : i32
    %24 = vector.broadcast %c7_i32 : i32 to vector<16x128xi32>
    %25 = arith.cmpi slt, %19, %24 : vector<16x128xi32>
    %26 = arith.extui %25 : vector<16x128xi1> to vector<16x128xi32>
    %27 = arith.sitofp %26 : vector<16x128xi32> to vector<16x128xf32>
    %c1_i32_5 = arith.constant 1 : i32
    %28 = tpu.dynamic_rotate %2 by %c1_i32_5 dim 0 : vector<16x128xf32>, i32 -> vector<16x128xf32>
    %29 = arith.mulf %28, %23 : vector<16x128xf32>
    %c15_i32 = arith.constant 15 : i32
    %30 = tpu.dynamic_rotate %2 by %c15_i32 dim 0 : vector<16x128xf32>, i32 -> vector<16x128xf32>
    %31 = arith.mulf %30, %27 : vector<16x128xf32>
    %32 = tpu.concatenate %29, %2, %31 in 1 : vector<16x128xf32>, vector<16x128xf32>, vector<16x128xf32> -> vector<16x384xf32>
    %33 = arith.truncf %32 : vector<16x384xf32> to vector<16x384xbf16>
    %c0_6 = arith.constant 0 : index
    %c0_7 = arith.constant 0 : index
    %34 = vector.load %arg2[%c0_6, %c0_7] : memref<384x128xbf16, #tpu.memory_space<vmem>>, vector<384x128xbf16>
    %cst_8 = arith.constant dense<0.000000e+00> : vector<16x128xf32>
    %35 = tpu.matmul %33, %34, %cst_8 {dimension_numbers = #tpu.dot_dimension_numbers<[1], [0], [0], [1], [0, 0, 1, 1], [], []>} : vector<16x384xbf16>, vector<384x128xbf16>, vector<16x128xf32> -> vector<16x128xf32>
    %c0_9 = arith.constant 0 : index
    %c0_10 = arith.constant 0 : index
    %36 = vector.load %arg3[%c0_9, %c0_10] : memref<1x128xf32, #tpu.memory_space<vmem>>, vector<1x128xf32>
    %37 = vector.broadcast %36 : vector<1x128xf32> to vector<16x128xf32>
    %38 = arith.addf %35, %37 : vector<16x128xf32>
    %cst_11 = arith.constant 0.000000e+00 : f32
    %39 = vector.broadcast %cst_11 : f32 to vector<16x128xf32>
    %40 = arith.maximumf %38, %39 : vector<16x128xf32>
    %c1_i32_12 = arith.constant 1 : i32
    %41 = tpu.dynamic_rotate %40 by %c1_i32_12 dim 0 : vector<16x128xf32>, i32 -> vector<16x128xf32>
    %42 = arith.mulf %41, %23 : vector<16x128xf32>
    %c15_i32_13 = arith.constant 15 : i32
    %43 = tpu.dynamic_rotate %40 by %c15_i32_13 dim 0 : vector<16x128xf32>, i32 -> vector<16x128xf32>
    %44 = arith.mulf %43, %27 : vector<16x128xf32>
    %45 = tpu.concatenate %42, %40, %44 in 1 : vector<16x128xf32>, vector<16x128xf32>, vector<16x128xf32> -> vector<16x384xf32>
    %46 = arith.truncf %45 : vector<16x384xf32> to vector<16x384xbf16>
    %c0_14 = arith.constant 0 : index
    %c0_15 = arith.constant 0 : index
    %47 = vector.load %arg4[%c0_14, %c0_15] : memref<384x128xbf16, #tpu.memory_space<vmem>>, vector<384x128xbf16>
    %cst_16 = arith.constant dense<0.000000e+00> : vector<16x128xf32>
    %48 = tpu.matmul %46, %47, %cst_16 {dimension_numbers = #tpu.dot_dimension_numbers<[1], [0], [0], [1], [0, 0, 1, 1], [], []>} : vector<16x384xbf16>, vector<384x128xbf16>, vector<16x128xf32> -> vector<16x128xf32>
    %c0_17 = arith.constant 0 : index
    %c0_18 = arith.constant 0 : index
    %49 = vector.load %arg5[%c0_17, %c0_18] : memref<1x128xf32, #tpu.memory_space<vmem>>, vector<1x128xf32>
    %50 = vector.broadcast %49 : vector<1x128xf32> to vector<16x128xf32>
    %51 = arith.addf %48, %50 : vector<16x128xf32>
    %cst_19 = arith.constant 0.000000e+00 : f32
    %52 = vector.broadcast %cst_19 : f32 to vector<16x128xf32>
    %53 = arith.maximumf %51, %52 : vector<16x128xf32>
    %c1_i32_20 = arith.constant 1 : i32
    %54 = tpu.dynamic_rotate %53 by %c1_i32_20 dim 0 : vector<16x128xf32>, i32 -> vector<16x128xf32>
    %55 = arith.mulf %54, %23 : vector<16x128xf32>
    %c15_i32_21 = arith.constant 15 : i32
    %56 = tpu.dynamic_rotate %53 by %c15_i32_21 dim 0 : vector<16x128xf32>, i32 -> vector<16x128xf32>
    %57 = arith.mulf %56, %27 : vector<16x128xf32>
    %58 = tpu.concatenate %55, %53, %57 in 1 : vector<16x128xf32>, vector<16x128xf32>, vector<16x128xf32> -> vector<16x384xf32>
    %59 = arith.truncf %58 : vector<16x384xf32> to vector<16x384xbf16>
    %c0_22 = arith.constant 0 : index
    %c0_23 = arith.constant 0 : index
    %60 = vector.load %arg6[%c0_22, %c0_23] : memref<384x128xbf16, #tpu.memory_space<vmem>>, vector<384x128xbf16>
    %cst_24 = arith.constant dense<0.000000e+00> : vector<16x128xf32>
    %61 = tpu.matmul %59, %60, %cst_24 {dimension_numbers = #tpu.dot_dimension_numbers<[1], [0], [0], [1], [0, 0, 1, 1], [], []>} : vector<16x384xbf16>, vector<384x128xbf16>, vector<16x128xf32> -> vector<16x128xf32>
    %c0_25 = arith.constant 0 : index
    %c0_26 = arith.constant 0 : index
    %62 = vector.load %arg7[%c0_25, %c0_26] : memref<1x128xf32, #tpu.memory_space<vmem>>, vector<1x128xf32>
    %63 = vector.broadcast %62 : vector<1x128xf32> to vector<16x128xf32>
    %64 = arith.addf %61, %63 : vector<16x128xf32>
    %cst_27 = arith.constant 0.000000e+00 : f32
    %65 = vector.broadcast %cst_27 : f32 to vector<16x128xf32>
    %66 = arith.maximumf %64, %65 : vector<16x128xf32>
    %c1_i32_28 = arith.constant 1 : i32
    %67 = tpu.dynamic_rotate %66 by %c1_i32_28 dim 0 : vector<16x128xf32>, i32 -> vector<16x128xf32>
    %68 = arith.mulf %67, %23 : vector<16x128xf32>
    %c15_i32_29 = arith.constant 15 : i32
    %69 = tpu.dynamic_rotate %66 by %c15_i32_29 dim 0 : vector<16x128xf32>, i32 -> vector<16x128xf32>
    %70 = arith.mulf %69, %27 : vector<16x128xf32>
    %71 = tpu.concatenate %68, %66, %70 in 1 : vector<16x128xf32>, vector<16x128xf32>, vector<16x128xf32> -> vector<16x384xf32>
    %72 = arith.truncf %71 : vector<16x384xf32> to vector<16x384xbf16>
    %c0_30 = arith.constant 0 : index
    %c0_31 = arith.constant 0 : index
    %73 = vector.load %arg8[%c0_30, %c0_31] : memref<384x128xbf16, #tpu.memory_space<vmem>>, vector<384x128xbf16>
    %cst_32 = arith.constant dense<0.000000e+00> : vector<16x128xf32>
    %74 = tpu.matmul %72, %73, %cst_32 {dimension_numbers = #tpu.dot_dimension_numbers<[1], [0], [0], [1], [0, 0, 1, 1], [], []>} : vector<16x384xbf16>, vector<384x128xbf16>, vector<16x128xf32> -> vector<16x128xf32>
    %c0_33 = arith.constant 0 : index
    %c0_34 = arith.constant 0 : index
    %75 = vector.load %arg9[%c0_33, %c0_34] : memref<1x128xf32, #tpu.memory_space<vmem>>, vector<1x128xf32>
    %76 = vector.broadcast %75 : vector<1x128xf32> to vector<16x128xf32>
    %77 = arith.addf %74, %76 : vector<16x128xf32>
    %cst_35 = arith.constant 0.000000e+00 : f32
    %78 = vector.broadcast %cst_35 : f32 to vector<16x128xf32>
    %79 = arith.maximumf %77, %78 : vector<16x128xf32>
    %80 = vector.shape_cast %79 : vector<16x128xf32> to vector<2x8x128xf32>
    %cst_36 = arith.constant dense<0.000000e+00> : vector<2x128xf32>
    %81 = vector.multi_reduction <add>, %80, %cst_36 [1] : vector<2x8x128xf32> to vector<2x128xf32>
    %82 = arith.truncf %81 : vector<2x128xf32> to vector<2x128xbf16>
    %c0_37 = arith.constant 0 : index
    %c0_38 = arith.constant 0 : index
    %83 = vector.load %arg10[%c0_37, %c0_38] : memref<128x128xbf16, #tpu.memory_space<vmem>>, vector<128x128xbf16>
    %cst_39 = arith.constant dense<0.000000e+00> : vector<2x128xf32>
    %84 = tpu.matmul %82, %83, %cst_39 {dimension_numbers = #tpu.dot_dimension_numbers<[1], [0], [0], [1], [0, 0, 1, 1], [], []>} : vector<2x128xbf16>, vector<128x128xbf16>, vector<2x128xf32> -> vector<2x128xf32>
    %c0_40 = arith.constant 0 : index
    %c0_41 = arith.constant 0 : index
    %85 = vector.load %arg11[%c0_40, %c0_41] : memref<1x128xf32, #tpu.memory_space<vmem>>, vector<1x128xf32>
    %86 = vector.broadcast %85 : vector<1x128xf32> to vector<2x128xf32>
    %87 = arith.addf %84, %86 : vector<2x128xf32>
    %c0_42 = arith.constant 0 : index
    %c0_43 = arith.constant 0 : index
    %88 = vector.load %arg12[%c0_42, %c0_43] : memref<2x128xf32, #tpu.memory_space<vmem>>, vector<2x128xf32>
    tpu.vector_store %arg12[%c0_42, %c0_43], %87 {strides = array<i32>} : memref<2x128xf32, #tpu.memory_space<vmem>>, vector<2x128xf32>,
    return
  }
  func.func @transform_0(%arg0: i32) -> (i32, i32) {
    %c0_i32 = arith.constant 0 : i32
    %c0_i32_0 = arith.constant 0 : i32
    return %arg0, %c0_i32 : i32, i32
  }
  func.func @transform_1(%arg0: i32) -> (i32, i32) {
    %c0_i32 = arith.constant 0 : i32
    %c0_i32_0 = arith.constant 0 : i32
    %c0_i32_1 = arith.constant 0 : i32
    return %c0_i32, %c0_i32_0 : i32, i32
  }
  func.func @transform_2(%arg0: i32) -> (i32, i32) {
    %c0_i32 = arith.constant 0 : i32
    %c0_i32_0 = arith.constant 0 : i32
    %c0_i32_1 = arith.constant 0 : i32
    return %c0_i32, %c0_i32_0 : i32, i32
  }
  func.func @transform_3(%arg0: i32) -> (i32, i32) {
    %c0_i32 = arith.constant 0 : i32
    %c0_i32_0 = arith.constant 0 : i32
    %c0_i32_1 = arith.constant 0 : i32
    return %c0_i32, %c0_i32_0 : i32, i32
  }
  func.func @transform_4(%arg0: i32) -> (i32, i32) {
    %c0_i32 = arith.constant 0 : i32
    %c0_i32_0 = arith.constant 0 : i32
    %c0_i32_1 = arith.constant 0 : i32
    return %c0_i32, %c0_i32_0 : i32, i32
  }
  func.func @transform_5(%arg0: i32) -> (i32, i32) {
    %c0_i32 = arith.constant 0 : i32
    %c0_i32_0 = arith.constant 0 : i32
    %c0_i32_1 = arith.constant 0 : i32
    return %c0_i32, %c0_i32_0 : i32, i32
  }
  func.func @transform_6(%arg0: i32) -> (i32, i32) {
    %c0_i32 = arith.constant 0 : i32
    %c0_i32_0 = arith.constant 0 : i32
    %c0_i32_1 = arith.constant 0 : i32
    return %c0_i32, %c0_i32_0 : i32, i32
  }
  func.func @transform_7(%arg0: i32) -> (i32, i32) {
    %c0_i32 = arith.constant 0 : i32
    %c0_i32_0 = arith.constant 0 : i32
    %c0_i32_1 = arith.constant 0 : i32
    return %c0_i32, %c0_i32_0 : i32, i32
  }
  func.func @transform_8(%arg0: i32) -> (i32, i32) {
    %c0_i32 = arith.constant 0 : i32
    %c0_i32_0 = arith.constant 0 : i32
    %c0_i32_1 = arith.constant 0 : i32
    return %c0_i32, %c0_i32_0 : i32, i32
  }
  func.func @transform_9(%arg0: i32) -> (i32, i32) {
    %c0_i32 = arith.constant 0 : i32
    %c0_i32_0 = arith.constant 0 : i32
    %c0_i32_1 = arith.constant 0 : i32
    return %c0_i32, %c0_i32_0 : i32, i32
  }
  func.func @transform_10(%arg0: i32) -> (i32, i32) {
    %c0_i32 = arith.constant 0 : i32
    %c0_i32_0 = arith.constant 0 : i32
    %c0_i32_1 = arith.constant 0 : i32
    return %c0_i32, %c0_i32_0 : i32, i32
  }
  func.func @transform_11(%arg0: i32) -> (i32, i32) {
    %c0_i32 = arith.constant 0 : i32
    %c0_i32_0 = arith.constant 0 : i32
    return %arg0, %c0_i32 : i32, i32
  }
}

</mosaic_0001>

<llo_original>
// kernel: tpu_custom_call.1
$region0: #{tpu_custom_call.1}
  #allocation0 [shape = 'u32[]', space=smem, size = 0x4, offset = 0x4, fixed_abs, tag = 'smem constant byte address 0x4 - core index']
  #allocation1 [shape = 'u32[144,128]{1,0:T(1,128)}', space=vmem, size = 0x12000, scoped, tag = 'internal scratch']
  %s0 = inlined_call_operand.hbm [shape: f32[16,64], index: 0, kind: input, shape index: {}]
  %s1 = inlined_call_operand.hbm [shape: bf16[384,128], index: 1, kind: input, shape index: {}]
  %s2 = inlined_call_operand.vmem [shape: f32[1,128], index: 2, kind: input, shape index: {}]
  %s3 = inlined_call_operand.hbm [shape: bf16[384,128], index: 3, kind: input, shape index: {}]
  %s4 = inlined_call_operand.vmem [shape: f32[1,128], index: 4, kind: input, shape index: {}]
  %s5 = inlined_call_operand.hbm [shape: bf16[384,128], index: 5, kind: input, shape index: {}]
  %s6 = inlined_call_operand.vmem [shape: f32[1,128], index: 6, kind: input, shape index: {}]
  %s7 = inlined_call_operand.hbm [shape: bf16[384,128], index: 7, kind: input, shape index: {}]
  %s8 = inlined_call_operand.vmem [shape: f32[1,128], index: 8, kind: input, shape index: {}]
  %s9 = inlined_call_operand.hbm [shape: bf16[128,128], index: 9, kind: input, shape index: {}]
  %s10 = inlined_call_operand.vmem [shape: f32[1,128], index: 10, kind: input, shape index: {}]
  %s11 = inlined_call_operand.hbm [shape: f32[2,128], index: 11, kind: output, shape index: {}]
  %s12 = sld [smem:[#allocation0]]
  $region78: #{tpu_custom_call.1} parent=0
    _
  %s14 = ssub.s32 1, %s12
  %s15 = scalar_select 0, %s14, %s12
  $region1: #{tpu_custom_call.1} parent=0
    #allocation2 [shape = 'u8[8192]{0}', space=vmem, size = 0x2000, scoped, tag = 'input window, operand 0, single buffered']
    #allocation3 [shape = 's32[1]{0}', space=sflag, size = 0x4, scoped, tag = 'scoped memory for tpu_custom_call.1']
    #allocation4 [shape = 's32[1]{0}', space=sflag, size = 0x4, scoped, tag = 'scoped memory for tpu_custom_call.1']
    #allocation5 [shape = 'u8[98304]{0}', space=vmem, size = 0x18000, scoped, tag = 'input window, operand 1, single buffered']
    #allocation6 [shape = 's32[1]{0}', space=sflag, size = 0x4, scoped, tag = 'scoped memory for tpu_custom_call.1']
    #allocation7 [shape = 'u8[98304]{0}', space=vmem, size = 0x18000, scoped, tag = 'input window, operand 3, single buffered']
    #allocation8 [shape = 'u8[98304]{0}', space=vmem, size = 0x18000, scoped, tag = 'input window, operand 5, single buffered']
    #allocation9 [shape = 's32[1]{0}', space=sflag, size = 0x4, scoped, tag = 'scoped memory for tpu_custom_call.1']
    #allocation10 [shape = 'u8[98304]{0}', space=vmem, size = 0x18000, scoped, tag = 'input window, operand 7, single buffered']
    #allocation11 [shape = 'u8[32768]{0}', space=vmem, size = 0x8000, scoped, tag = 'input window, operand 9, single buffered']
    #allocation12 [shape = 's32[1]{0}', space=sflag, size = 0x4, scoped, tag = 'scoped memory for tpu_custom_call.1']
    #allocation13 [shape = 'u8[1024]{0}', space=vmem, size = 0x400, scoped, tag = 'output window, operand 0, single buffered']
    %16 = vsyncpa [#allocation3], 0
    %17 = vsyncpa [#allocation6], 0
    %18 = vsyncpa [#allocation9], 0
    %19 = vsyncpa [#allocation12], 0
    %20 = vsyncpa [#allocation4], 0
    // Predicated region
    $region2: #{tpu_custom_call.1} parent=1 // pred_check
      _
    $region3: #{tpu_custom_call.1} parent=1 // pred_check_branch
      %22 = sbr.rel (0) target = $region5
    $region4: #{tpu_custom_call.1} parent=1 // pred_region
      %s24 = ssub.s32 256, 256
      %25 = vsyncadd [#allocation3], %s24
      %s26 = sshll.u32 [#allocation2], 4
      %s27 = int_to_ptr.vmem [resolvable:$true] %s26
      %32 = dma.hbm_to_vmem [thread:$0]  %s0, 256, %s27, [#allocation3], 128, 128, 8
    $region5: #{tpu_custom_call.1} parent=1 // pred_fallthru
      _
    // Predicated region
    $region6: #{tpu_custom_call.1} parent=1 // pred_check
      _
    $region7: #{tpu_custom_call.1} parent=1 // pred_check_branch
      %34 = sbr.rel (0) target = $region9
    $region8: #{tpu_custom_call.1} parent=1 // pred_region
      %s36 = ssub.s32 3072, 3072
      %37 = vsyncadd [#allocation6], %s36
      %s38 = sshll.u32 [#allocation5], 4
      %s39 = int_to_ptr.vmem [resolvable:$true] %s38
      %44 = dma.hbm_to_vmem [thread:$0]  %s1, 3072, %s39, [#allocation6], 64, 64, 4
    $region9: #{tpu_custom_call.1} parent=1 // pred_fallthru
      _
    // Predicated region
    $region10: #{tpu_custom_call.1} parent=1 // pred_check
      _
    $region11: #{tpu_custom_call.1} parent=1 // pred_check_branch
      %46 = sbr.rel (0) target = $region13
    $region12: #{tpu_custom_call.1} parent=1 // pred_region
      _
    $region13: #{tpu_custom_call.1} parent=1 // pred_fallthru
      _
    // Predicated region
    $region14: #{tpu_custom_call.1} parent=1 // pred_check
      _
    $region15: #{tpu_custom_call.1} parent=1 // pred_check_branch
      %48 = sbr.rel (0) target = $region17
    $region16: #{tpu_custom_call.1} parent=1 // pred_region
      %s50 = ssub.s32 3072, 3072
      %51 = vsyncadd [#allocation6], %s50
      %s52 = sshll.u32 [#allocation7], 4
      %s53 = int_to_ptr.vmem [resolvable:$true] %s52
      %58 = dma.hbm_to_vmem [thread:$0]  %s3, 3072, %s53, [#allocation6], 64, 64, 4
    $region17: #{tpu_custom_call.1} parent=1 // pred_fallthru
      _
    // Predicated region
    $region18: #{tpu_custom_call.1} parent=1 // pred_check
      _
    $region19: #{tpu_custom_call.1} parent=1 // pred_check_branch
      %60 = sbr.rel (0) target = $region21
    $region20: #{tpu_custom_call.1} parent=1 // pred_region
      _
    $region21: #{tpu_custom_call.1} parent=1 // pred_fallthru
      _
    // Predicated region
    $region22: #{tpu_custom_call.1} parent=1 // pred_check
      _
    $region23: #{tpu_custom_call.1} parent=1 // pred_check_branch
      %62 = sbr.rel (0) target = $region25
    $region24: #{tpu_custom_call.1} parent=1 // pred_region
      %s64 = ssub.s32 3072, 3072
      %65 = vsyncadd [#allocation9], %s64
      %s66 = sshll.u32 [#allocation8], 4
      %s67 = int_to_ptr.vmem [resolvable:$true] %s66
      %72 = dma.hbm_to_vmem [thread:$0]  %s5, 3072, %s67, [#allocation9], 64, 64, 4
    $region25: #{tpu_custom_call.1} parent=1 // pred_fallthru
      _
    // Predicated region
    $region26: #{tpu_custom_call.1} parent=1 // pred_check
      _
    $region27: #{tpu_custom_call.1} parent=1 // pred_check_branch
      %74 = sbr.rel (0) target = $region29
    $region28: #{tpu_custom_call.1} parent=1 // pred_region
      _
    $region29: #{tpu_custom_call.1} parent=1 // pred_fallthru
      _
    // Predicated region
    $region30: #{tpu_custom_call.1} parent=1 // pred_check
      _
    $region31: #{tpu_custom_call.1} parent=1 // pred_check_branch
      %76 = sbr.rel (0) target = $region33
    $region32: #{tpu_custom_call.1} parent=1 // pred_region
      %s78 = ssub.s32 3072, 3072
      %79 = vsyncadd [#allocation9], %s78
      %s80 = sshll.u32 [#allocation10], 4
      %s81 = int_to_ptr.vmem [resolvable:$true] %s80
      %86 = dma.hbm_to_vmem [thread:$0]  %s7, 3072, %s81, [#allocation9], 64, 64, 4
    $region33: #{tpu_custom_call.1} parent=1 // pred_fallthru
      _
    // Predicated region
    $region34: #{tpu_custom_call.1} parent=1 // pred_check
      _
    $region35: #{tpu_custom_call.1} parent=1 // pred_check_branch
      %88 = sbr.rel (0) target = $region37
    $region36: #{tpu_custom_call.1} parent=1 // pred_region
      _
    $region37: #{tpu_custom_call.1} parent=1 // pred_fallthru
      _
    // Predicated region
    $region38: #{tpu_custom_call.1} parent=1 // pred_check
      _
    $region39: #{tpu_custom_call.1} parent=1 // pred_check_branch
      %90 = sbr.rel (0) target = $region41
    $region40: #{tpu_custom_call.1} parent=1 // pred_region
      %s92 = ssub.s32 1024, 1024
      %93 = vsyncadd [#allocation12], %s92
      %s94 = sshll.u32 [#allocation11], 4
      %s95 = int_to_ptr.vmem [resolvable:$true] %s94
      %100 = dma.hbm_to_vmem [thread:$0]  %s9, 1024, %s95, [#allocation12], 64, 64, 4
    $region41: #{tpu_custom_call.1} parent=1 // pred_fallthru
      _
    // Predicated region
    $region42: #{tpu_custom_call.1} parent=1 // pred_check
      _
    $region43: #{tpu_custom_call.1} parent=1 // pred_check_branch
      %102 = sbr.rel (0) target = $region45
    $region44: #{tpu_custom_call.1} parent=1 // pred_region
      _
    $region45: #{tpu_custom_call.1} parent=1 // pred_fallthru
      _
    // Predicated region
    $region46: #{tpu_custom_call.1} parent=1 // pred_check
      _
    $region47: #{tpu_custom_call.1} parent=1 // pred_check_branch
      %104 = sbr.rel (0) target = $region49
    $region48: #{tpu_custom_call.1} parent=1 // pred_region
      %105 = dma.done [#allocation3], 256
    $region49: #{tpu_custom_call.1} parent=1 // pred_fallthru
      _
    // Predicated region
    $region50: #{tpu_custom_call.1} parent=1 // pred_check
      _
    $region51: #{tpu_custom_call.1} parent=1 // pred_check_branch
      %107 = sbr.rel (0) target = $region53
    $region52: #{tpu_custom_call.1} parent=1 // pred_region
      %108 = dma.done [#allocation6], 3072
    $region53: #{tpu_custom_call.1} parent=1 // pred_fallthru
      _
    // Predicated region
    $region54: #{tpu_custom_call.1} parent=1 // pred_check
      _
    $region55: #{tpu_custom_call.1} parent=1 // pred_check_branch
      %110 = sbr.rel (0) target = $region57
    $region56: #{tpu_custom_call.1} parent=1 // pred_region
      %111 = dma.done [#allocation6], 3072
    $region57: #{tpu_custom_call.1} parent=1 // pred_fallthru
      _
    // Predicated region
    $region58: #{tpu_custom_call.1} parent=1 // pred_check
      _
    $region59: #{tpu_custom_call.1} parent=1 // pred_check_branch
      %113 = sbr.rel (0) target = $region61
    $region60: #{tpu_custom_call.1} parent=1 // pred_region
      %114 = dma.done [#allocation9], 3072
    $region61: #{tpu_custom_call.1} parent=1 // pred_fallthru
      _
    // Predicated region
    $region62: #{tpu_custom_call.1} parent=1 // pred_check
      _
    $region63: #{tpu_custom_call.1} parent=1 // pred_check_branch
      %116 = sbr.rel (0) target = $region65
    $region64: #{tpu_custom_call.1} parent=1 // pred_region
      %117 = dma.done [#allocation9], 3072
    $region65: #{tpu_custom_call.1} parent=1 // pred_fallthru
      _
    // Predicated region
    $region66: #{tpu_custom_call.1} parent=1 // pred_check
      _
    $region67: #{tpu_custom_call.1} parent=1 // pred_check_branch
      %119 = sbr.rel (0) target = $region69
    $region68: #{tpu_custom_call.1} parent=1 // pred_region
      %120 = dma.done [#allocation12], 1024
    $region69: #{tpu_custom_call.1} parent=1 // pred_fallthru
      _
    %v122 = vld [vmem:[#allocation2] sm:$0xff]
    %v123 = vld [vmem:[#allocation2 + $0x8] sm:$0xff]
    %vm124 = vcmask 523264
    %v125 = vsel %vm124, %v122, 0.0
    %v126 = vsel %vm124, %v123, 0.0
    %v127 = vlaneseq
    %v128 = vshrl.u32 %v127, 7
    %v129 = vadd.s32 %v128, 8
    %vm130 = vcmp.lt.s32.totalorder %v128, 0
    %v131 = vsub.s32 0, %v128
    %v132 = vsel %vm130, %v131, %v128
    %v133 = vshrl.u32 %v132, 3
    %v134 = vand.u32 %v132, 7
    %v135 = vsub.s32 0, %v134
    %v136 = vsel %vm130, %v135, %v134
    %vm137 = vcmp.lt.s32.totalorder %v129, 0
    %v138 = vsub.s32 0, %v129
    %v139 = vsel %vm137, %v138, %v129
    %v140 = vshrl.u32 %v139, 3
    %v141 = vand.u32 %v139, 7
    %v142 = vsub.s32 0, %v141
    %v143 = vsel %vm137, %v142, %v141
    %vm144 = vcmp.ne.s32.totalorder %v136, 0
    %vm145 = vcmp.ne.s32.totalorder %v143, 0
    %vm146 = vcmp.lt.s32.totalorder %v136, 0
    %vm147 = vcmp.lt.s32.totalorder %v143, 0
    %vm148 = vmand %vm146, %vm144
    %vm149 = vmand %vm147, %vm145
    %v150 = vadd.s32 %v136, 8
    %v151 = vadd.s32 %v143, 8
    %v152 = vsel %vm148, %v150, %v136
    %v153 = vsel %vm149, %v151, %v143
    %vm154 = vcmp.gt.s32.totalorder %v152, 0
    %vm155 = vcmp.gt.s32.totalorder %v153, 0
    %v156 = vsel %vm154, 1, 0
    %v157 = vsel %vm155, 1, 0
    %v158 = vcvt.s32.f32 %v156
    %v159 = vcvt.s32.f32 %v157
    %vm160 = vcmp.lt.s32.totalorder %v152, 7
    %vm161 = vcmp.lt.s32.totalorder %v153, 7
    %v162 = vsel %vm160, 1, 0
    %v163 = vsel %vm161, 1, 0
    %v164 = vcvt.s32.f32 %v162
    %v165 = vcvt.s32.f32 %v163
    %v166 = vrot.slane %v125, 7
    %v167 = vrot.slane %v126, 7
    %vm168 = vcmp.lt.s32.totalorder %v128, 1
    %v169 = vsel %vm168, %v166, %v167
    %v170 = vsel %vm168, %v167, %v166
    %v171 = vmul.f32 %v170, %v158
    %v172 = vmul.f32 %v169, %v159
    %v173 = vrot.slane %v125, 1
    %v174 = vrot.slane %v126, 1
    %vm175 = vcmp.lt.s32.totalorder %v128, 7
    %v176 = vsel %vm175, %v173, %v174
    %v177 = vsel %vm175, %v174, %v173
    %v178 = vmul.f32 %v176, %v164
    %v179 = vmul.f32 %v177, %v165
    %v180 = vpack.c.bf16 %v172, %v171
    %v181 = vpack.c.bf16 %v126, %v125
    %v182 = vpack.c.bf16 %v179, %v178
    %v183 = vld [vmem:[#allocation5] sm:$0xf]
    %v184 = vld [vmem:[#allocation5 + $0x4] sm:$0xf]
    %v185 = vld [vmem:[#allocation5 + $0x8] sm:$0xf]
    %v186 = vld [vmem:[#allocation5 + $0xc] sm:$0xf]
    %v187 = vld [vmem:[#allocation5 + $0x10] sm:$0xf]
    %v188 = vld [vmem:[#allocation5 + $0x14] sm:$0xf]
    %v189 = vld [vmem:[#allocation5 + $0x18] sm:$0xf]
    %v190 = vld [vmem:[#allocation5 + $0x1c] sm:$0xf]
    %v191 = vld [vmem:[#allocation5 + $0x20] sm:$0xf]
    %v192 = vld [vmem:[#allocation5 + $0x24] sm:$0xf]
    %v193 = vld [vmem:[#allocation5 + $0x28] sm:$0xf]
    %v194 = vld [vmem:[#allocation5 + $0x2c] sm:$0xf]
    %v195 = vld [vmem:[#allocation5 + $0x30] sm:$0xf]
    %v196 = vld [vmem:[#allocation5 + $0x34] sm:$0xf]
    %v197 = vld [vmem:[#allocation5 + $0x38] sm:$0xf]
    %v198 = vld [vmem:[#allocation5 + $0x3c] sm:$0xf]
    %v199 = vld [vmem:[#allocation5 + $0x40] sm:$0xf]
    %v200 = vld [vmem:[#allocation5 + $0x44] sm:$0xf]
    %v201 = vld [vmem:[#allocation5 + $0x48] sm:$0xf]
    %v202 = vld [vmem:[#allocation5 + $0x4c] sm:$0xf]
    %v203 = vld [vmem:[#allocation5 + $0x50] sm:$0xf]
    %v204 = vld [vmem:[#allocation5 + $0x54] sm:$0xf]
    %v205 = vld [vmem:[#allocation5 + $0x58] sm:$0xf]
    %v206 = vld [vmem:[#allocation5 + $0x5c] sm:$0xf]
    %v207 = vld [vmem:[#allocation5 + $0x60] sm:$0xf]
    %v208 = vld [vmem:[#allocation5 + $0x64] sm:$0xf]
    %v209 = vld [vmem:[#allocation5 + $0x68] sm:$0xf]
    %v210 = vld [vmem:[#allocation5 + $0x6c] sm:$0xf]
    %v211 = vld [vmem:[#allocation5 + $0x70] sm:$0xf]
    %v212 = vld [vmem:[#allocation5 + $0x74] sm:$0xf]
    %v213 = vld [vmem:[#allocation5 + $0x78] sm:$0xf]
    %v214 = vld [vmem:[#allocation5 + $0x7c] sm:$0xf]
    %v215 = vld [vmem:[#allocation5 + $0x80] sm:$0xf]
    %v216 = vld [vmem:[#allocation5 + $0x84] sm:$0xf]
    %v217 = vld [vmem:[#allocation5 + $0x88] sm:$0xf]
    %v218 = vld [vmem:[#allocation5 + $0x8c] sm:$0xf]
    %v219 = vld [vmem:[#allocation5 + $0x90] sm:$0xf]
    %v220 = vld [vmem:[#allocation5 + $0x94] sm:$0xf]
    %v221 = vld [vmem:[#allocation5 + $0x98] sm:$0xf]
    %v222 = vld [vmem:[#allocation5 + $0x9c] sm:$0xf]
    %v223 = vld [vmem:[#allocation5 + $0xa0] sm:$0xf]
    %v224 = vld [vmem:[#allocation5 + $0xa4] sm:$0xf]
    %v225 = vld [vmem:[#allocation5 + $0xa8] sm:$0xf]
    %v226 = vld [vmem:[#allocation5 + $0xac] sm:$0xf]
    %v227 = vld [vmem:[#allocation5 + $0xb0] sm:$0xf]
    %v228 = vld [vmem:[#allocation5 + $0xb4] sm:$0xf]
    %v229 = vld [vmem:[#allocation5 + $0xb8] sm:$0xf]
    %v230 = vld [vmem:[#allocation5 + $0xbc] sm:$0xf]
    %v231 = vld [vmem:[%s2] sm:$0x1]
    %v233 = vlaneseq
    %v234 = vshrl.u32 %v233, 7
    %v235 = vsub.s32 0, %v234
    %v236 = vrot.slane %v231, %v235
    %v286 = vunpack.c.l.b16 %v183
    %v287 = vunpack.c.l.b16 %v184
    %v288 = vunpack.c.l.b16 %v185
    %v289 = vunpack.c.l.b16 %v186
    %v290 = vunpack.c.l.b16 %v187
    %v291 = vunpack.c.l.b16 %v188
    %v292 = vunpack.c.l.b16 %v189
    %v293 = vunpack.c.l.b16 %v190
    %v294 = vunpack.c.l.b16 %v191
    %v295 = vunpack.c.l.b16 %v192
    %v296 = vunpack.c.l.b16 %v193
    %v297 = vunpack.c.l.b16 %v194
    %v298 = vunpack.c.l.b16 %v195
    %v299 = vunpack.c.l.b16 %v196
    %v300 = vunpack.c.l.b16 %v197
    %v301 = vunpack.c.l.b16 %v198
    %v302 = vunpack.c.l.b16 %v199
    %v303 = vunpack.c.l.b16 %v200
    %v304 = vunpack.c.l.b16 %v201
    %v305 = vunpack.c.l.b16 %v202
    %v306 = vunpack.c.l.b16 %v203
    %v307 = vunpack.c.l.b16 %v204
    %v308 = vunpack.c.l.b16 %v205
    %v309 = vunpack.c.l.b16 %v206
    %v310 = vunpack.c.l.b16 %v207
    %v311 = vunpack.c.l.b16 %v208
    %v312 = vunpack.c.l.b16 %v209
    %v313 = vunpack.c.l.b16 %v210
    %v314 = vunpack.c.l.b16 %v211
    %v315 = vunpack.c.l.b16 %v212
    %v316 = vunpack.c.l.b16 %v213
    %v317 = vunpack.c.l.b16 %v214
    %v318 = vunpack.c.l.b16 %v215
    %v319 = vunpack.c.l.b16 %v216
    %v320 = vunpack.c.l.b16 %v217
    %v321 = vunpack.c.l.b16 %v218
    %v322 = vunpack.c.l.b16 %v219
    %v323 = vunpack.c.l.b16 %v220
    %v324 = vunpack.c.l.b16 %v221
    %v325 = vunpack.c.l.b16 %v222
    %v326 = vunpack.c.l.b16 %v223
    %v327 = vunpack.c.l.b16 %v224
    %v328 = vunpack.c.l.b16 %v225
    %v329 = vunpack.c.l.b16 %v226
    %v330 = vunpack.c.l.b16 %v227
    %v331 = vunpack.c.l.b16 %v228
    %v332 = vunpack.c.l.b16 %v229
    %v333 = vunpack.c.l.b16 %v230
    %v334 = vpack.c.b16 %v287, %v286
    %v335 = vpack.c.b16 %v289, %v288
    %v336 = vpack.c.b16 %v291, %v290
    %v337 = vpack.c.b16 %v293, %v292
    %v338 = vpack.c.b16 %v295, %v294
    %v339 = vpack.c.b16 %v297, %v296
    %v340 = vpack.c.b16 %v299, %v298
    %v341 = vpack.c.b16 %v301, %v300
    %v342 = vpack.c.b16 %v303, %v302
    %v343 = vpack.c.b16 %v305, %v304
    %v344 = vpack.c.b16 %v307, %v306
    %v345 = vpack.c.b16 %v309, %v308
    %v346 = vpack.c.b16 %v311, %v310
    %v347 = vpack.c.b16 %v313, %v312
    %v348 = vpack.c.b16 %v315, %v314
    %v349 = vpack.c.b16 %v317, %v316
    %v350 = vpack.c.b16 %v319, %v318
    %v351 = vpack.c.b16 %v321, %v320
    %v352 = vpack.c.b16 %v323, %v322
    %v353 = vpack.c.b16 %v325, %v324
    %v354 = vpack.c.b16 %v327, %v326
    %v355 = vpack.c.b16 %v329, %v328
    %v356 = vpack.c.b16 %v331, %v330
    %v357 = vpack.c.b16 %v333, %v332
    %382 = vmatprep.subr.bf16.mxu0 0
    %383 = vmatpush1.bf16.msra.mxu0 %v341
    %384 = vmatprep.subr.bf16.mxu0 0
    %385 = vmatpush1.bf16.msra.mxu0 %v340
    %386 = vmatprep.subr.bf16.mxu0 0
    %387 = vmatpush1.bf16.msra.mxu0 %v339
    %388 = vmatprep.subr.bf16.mxu0 0
    %389 = vmatpush1.bf16.msra.mxu0 %v338
    %390 = vmatprep.subr.bf16.mxu0 0
    %391 = vmatpush1.bf16.msra.mxu0 %v337
    %392 = vmatprep.subr.bf16.mxu0 0
    %393 = vmatpush1.bf16.msra.mxu0 %v336
    %394 = vmatprep.subr.bf16.mxu0 0
    %395 = vmatpush1.bf16.msra.mxu0 %v335
    %396 = vmatprep.subr.bf16.mxu0 0
    %397 = vmatpush1.bf16.msra.mxu0 %v334
    %398 = vmatprep.subr.bf16.mxu0 0
    %399 = vmatpush2.bf16.msra.mxu0 %v349
    %400 = vmatprep.subr.bf16.mxu0 0
    %401 = vmatpush2.bf16.msra.mxu0 %v348
    %402 = vmatprep.subr.bf16.mxu0 0
    %403 = vmatpush2.bf16.msra.mxu0 %v347
    %404 = vmatprep.subr.bf16.mxu0 0
    %405 = vmatpush2.bf16.msra.mxu0 %v346
    %406 = vmatprep.subr.bf16.mxu0 0
    %407 = vmatpush2.bf16.msra.mxu0 %v345
    %408 = vmatprep.subr.bf16.mxu0 0
    %409 = vmatpush2.bf16.msra.mxu0 %v344
    %410 = vmatprep.subr.bf16.mxu0 0
    %411 = vmatpush2.bf16.msra.mxu0 %v343
    %412 = vmatprep.subr.bf16.mxu0 0
    %413 = vmatpush2.bf16.msra.mxu0 %v342
    %414 = vmatprep.mubr.bf16.mxu0 %v181
    %415 = vmatmul.mubr.bf16.gmra.mxu0 %v180
    %v416 = vpop.f32.mrf.mxu0
    %v417 = vadd.f32 %v236, %v416
    %v418 = vpop.f32.mrf.mxu0
    %v419 = vpop.f32.mrf.mxu0
    %v420 = vadd.f32 %v236, %v419
    %v421 = vpop.f32.mrf.mxu0
    %422 = vdwg.mxu0
    %423 = vmatprep.subr.bf16.mxu0 0
    %424 = vmatpush1.bf16.msra.mxu0 %v357
    %425 = vmatprep.subr.bf16.mxu0 0
    %426 = vmatpush1.bf16.msra.mxu0 %v356
    %427 = vmatprep.subr.bf16.mxu0 0
    %428 = vmatpush1.bf16.msra.mxu0 %v355
    %429 = vmatprep.subr.bf16.mxu0 0
    %430 = vmatpush1.bf16.msra.mxu0 %v354
    %431 = vmatprep.subr.bf16.mxu0 0
    %432 = vmatpush1.bf16.msra.mxu0 %v353
    %433 = vmatprep.subr.bf16.mxu0 0
    %434 = vmatpush1.bf16.msra.mxu0 %v352
    %435 = vmatprep.subr.bf16.mxu0 0
    %436 = vmatpush1.bf16.msra.mxu0 %v351
    %437 = vmatprep.subr.bf16.mxu0 0
    %438 = vmatpush1.bf16.msra.mxu0 %v350
    %439 = vmatprep.subr.bf16.mxu0 0
    %440 = vmatpush2.bf16.msra.mxu0 0
    %441 = vmatprep.subr.bf16.mxu0 0
    %442 = vmatpush2.bf16.msra.mxu0 0
    %443 = vmatprep.subr.bf16.mxu0 0
    %444 = vmatpush2.bf16.msra.mxu0 0
    %445 = vmatprep.subr.bf16.mxu0 0
    %446 = vmatpush2.bf16.msra.mxu0 0
    %447 = vmatprep.subr.bf16.mxu0 0
    %448 = vmatpush2.bf16.msra.mxu0 0
    %449 = vmatprep.subr.bf16.mxu0 0
    %450 = vmatpush2.bf16.msra.mxu0 0
    %451 = vmatprep.subr.bf16.mxu0 0
    %452 = vmatpush2.bf16.msra.mxu0 0
    %453 = vmatprep.subr.bf16.mxu0 0
    %454 = vmatpush2.bf16.msra.mxu0 0
    %455 = vmatprep.mubr.bf16.mxu0 0
    %456 = vmatmul.mubr.bf16.gmra.mxu0 %v182
    %v457 = vpop.f32.mrf.mxu0
    %v458 = vadd.f32 %v417, %v457
    %v459 = vpop.f32.mrf.mxu0
    %v460 = vpop.f32.mrf.mxu0
    %v461 = vadd.f32 %v420, %v460
    %v462 = vpop.f32.mrf.mxu0
    %463 = vdwg.mxu0
    %v464 = vmax.f32 %v458, 0.0
    %v465 = vmax.f32 %v461, 0.0
    %v466 = vrot.slane %v464, 7
    %v467 = vrot.slane %v465, 7
    %v468 = vsel %vm168, %v466, %v467
    %v469 = vsel %vm168, %v467, %v466
    %v470 = vmul.f32 %v469, %v158
    %v471 = vmul.f32 %v468, %v159
    %v472 = vrot.slane %v464, 1
    %v473 = vrot.slane %v465, 1
    %v474 = vsel %vm175, %v472, %v473
    %v475 = vsel %vm175, %v473, %v472
    %v476 = vmul.f32 %v474, %v164
    %v477 = vmul.f32 %v475, %v165
    %v478 = vpack.c.bf16 %v471, %v470
    %v479 = vpack.c.bf16 %v465, %v464
    %v480 = vpack.c.bf16 %v477, %v476
    %v481 = vld [vmem:[#allocation7] sm:$0xf]
    %v482 = vld [vmem:[#allocation7 + $0x4] sm:$0xf]
    %v483 = vld [vmem:[#allocation7 + $0x8] sm:$0xf]
    %v484 = vld [vmem:[#allocation7 + $0xc] sm:$0xf]
    %v485 = vld [vmem:[#allocation7 + $0x10] sm:$0xf]
    %v486 = vld [vmem:[#allocation7 + $0x14] sm:$0xf]
    %v487 = vld [vmem:[#allocation7 + $0x18] sm:$0xf]
    %v488 = vld [vmem:[#allocation7 + $0x1c] sm:$0xf]
    %v489 = vld [vmem:[#allocation7 + $0x20] sm:$0xf]
    %v490 = vld [vmem:[#allocation7 + $0x24] sm:$0xf]
    %v491 = vld [vmem:[#allocation7 + $0x28] sm:$0xf]
    %v492 = vld [vmem:[#allocation7 + $0x2c] sm:$0xf]
    %v493 = vld [vmem:[#allocation7 + $0x30] sm:$0xf]
    %v494 = vld [vmem:[#allocation7 + $0x34] sm:$0xf]
    %v495 = vld [vmem:[#allocation7 + $0x38] sm:$0xf]
    %v496 = vld [vmem:[#allocation7 + $0x3c] sm:$0xf]
    %v497 = vld [vmem:[#allocation7 + $0x40] sm:$0xf]
    %v498 = vld [vmem:[#allocation7 + $0x44] sm:$0xf]
    %v499 = vld [vmem:[#allocation7 + $0x48] sm:$0xf]
    %v500 = vld [vmem:[#allocation7 + $0x4c] sm:$0xf]
    %v501 = vld [vmem:[#allocation7 + $0x50] sm:$0xf]
    %v502 = vld [vmem:[#allocation7 + $0x54] sm:$0xf]
    %v503 = vld [vmem:[#allocation7 + $0x58] sm:$0xf]
    %v504 = vld [vmem:[#allocation7 + $0x5c] sm:$0xf]
    %v505 = vld [vmem:[#allocation7 + $0x60] sm:$0xf]
    %v506 = vld [vmem:[#allocation7 + $0x64] sm:$0xf]
    %v507 = vld [vmem:[#allocation7 + $0x68] sm:$0xf]
    %v508 = vld [vmem:[#allocation7 + $0x6c] sm:$0xf]
    %v509 = vld [vmem:[#allocation7 + $0x70] sm:$0xf]
    %v510 = vld [vmem:[#allocation7 + $0x74] sm:$0xf]
    %v511 = vld [vmem:[#allocation7 + $0x78] sm:$0xf]
    %v512 = vld [vmem:[#allocation7 + $0x7c] sm:$0xf]
    %v513 = vld [vmem:[#allocation7 + $0x80] sm:$0xf]
    %v514 = vld [vmem:[#allocation7 + $0x84] sm:$0xf]
    %v515 = vld [vmem:[#allocation7 + $0x88] sm:$0xf]
    %v516 = vld [vmem:[#allocation7 + $0x8c] sm:$0xf]
    %v517 = vld [vmem:[#allocation7 + $0x90] sm:$0xf]
    %v518 = vld [vmem:[#allocation7 + $0x94] sm:$0xf]
    %v519 = vld [vmem:[#allocation7 + $0x98] sm:$0xf]
    %v520 = vld [vmem:[#allocation7 + $0x9c] sm:$0xf]
    %v521 = vld [vmem:[#allocation7 + $0xa0] sm:$0xf]
    %v522 = vld [vmem:[#allocation7 + $0xa4] sm:$0xf]
    %v523 = vld [vmem:[#allocation7 + $0xa8] sm:$0xf]
    %v524 = vld [vmem:[#allocation7 + $0xac] sm:$0xf]
    %v525 = vld [vmem:[#allocation7 + $0xb0] sm:$0xf]
    %v526 = vld [vmem:[#allocation7 + $0xb4] sm:$0xf]
    %v527 = vld [vmem:[#allocation7 + $0xb8] sm:$0xf]
    %v528 = vld [vmem:[#allocation7 + $0xbc] sm:$0xf]
    %v529 = vld [vmem:[%s4] sm:$0x1]
    %v531 = vlaneseq
    %v532 = vshrl.u32 %v531, 7
    %v533 = vsub.s32 0, %v532
    %v534 = vrot.slane %v529, %v533
    %v584 = vunpack.c.l.b16 %v481
    %v585 = vunpack.c.l.b16 %v482
    %v586 = vunpack.c.l.b16 %v483
    %v587 = vunpack.c.l.b16 %v484
    %v588 = vunpack.c.l.b16 %v485
    %v589 = vunpack.c.l.b16 %v486
    %v590 = vunpack.c.l.b16 %v487
    %v591 = vunpack.c.l.b16 %v488
    %v592 = vunpack.c.l.b16 %v489
    %v593 = vunpack.c.l.b16 %v490
    %v594 = vunpack.c.l.b16 %v491
    %v595 = vunpack.c.l.b16 %v492
    %v596 = vunpack.c.l.b16 %v493
    %v597 = vunpack.c.l.b16 %v494
    %v598 = vunpack.c.l.b16 %v495
    %v599 = vunpack.c.l.b16 %v496
    %v600 = vunpack.c.l.b16 %v497
    %v601 = vunpack.c.l.b16 %v498
    %v602 = vunpack.c.l.b16 %v499
    %v603 = vunpack.c.l.b16 %v500
    %v604 = vunpack.c.l.b16 %v501
    %v605 = vunpack.c.l.b16 %v502
    %v606 = vunpack.c.l.b16 %v503
    %v607 = vunpack.c.l.b16 %v504
    %v608 = vunpack.c.l.b16 %v505
    %v609 = vunpack.c.l.b16 %v506
    %v610 = vunpack.c.l.b16 %v507
    %v611 = vunpack.c.l.b16 %v508
    %v612 = vunpack.c.l.b16 %v509
    %v613 = vunpack.c.l.b16 %v510
    %v614 = vunpack.c.l.b16 %v511
    %v615 = vunpack.c.l.b16 %v512
    %v616 = vunpack.c.l.b16 %v513
    %v617 = vunpack.c.l.b16 %v514
    %v618 = vunpack.c.l.b16 %v515
    %v619 = vunpack.c.l.b16 %v516
    %v620 = vunpack.c.l.b16 %v517
    %v621 = vunpack.c.l.b16 %v518
    %v622 = vunpack.c.l.b16 %v519
    %v623 = vunpack.c.l.b16 %v520
    %v624 = vunpack.c.l.b16 %v521
    %v625 = vunpack.c.l.b16 %v522
    %v626 = vunpack.c.l.b16 %v523
    %v627 = vunpack.c.l.b16 %v524
    %v628 = vunpack.c.l.b16 %v525
    %v629 = vunpack.c.l.b16 %v526
    %v630 = vunpack.c.l.b16 %v527
    %v631 = vunpack.c.l.b16 %v528
    %v632 = vpack.c.b16 %v585, %v584
    %v633 = vpack.c.b16 %v587, %v586
    %v634 = vpack.c.b16 %v589, %v588
    %v635 = vpack.c.b16 %v591, %v590
    %v636 = vpack.c.b16 %v593, %v592
    %v637 = vpack.c.b16 %v595, %v594
    %v638 = vpack.c.b16 %v597, %v596
    %v639 = vpack.c.b16 %v599, %v598
    %v640 = vpack.c.b16 %v601, %v600
    %v641 = vpack.c.b16 %v603, %v602
    %v642 = vpack.c.b16 %v605, %v604
    %v643 = vpack.c.b16 %v607, %v606
    %v644 = vpack.c.b16 %v609, %v608
    %v645 = vpack.c.b16 %v611, %v610
    %v646 = vpack.c.b16 %v613, %v612
    %v647 = vpack.c.b16 %v615, %v614
    %v648 = vpack.c.b16 %v617, %v616
    %v649 = vpack.c.b16 %v619, %v618
    %v650 = vpack.c.b16 %v621, %v620
    %v651 = vpack.c.b16 %v623, %v622
    %v652 = vpack.c.b16 %v625, %v624
    %v653 = vpack.c.b16 %v627, %v626
    %v654 = vpack.c.b16 %v629, %v628
    %v655 = vpack.c.b16 %v631, %v630
    %680 = vmatprep.subr.bf16.mxu0 0
    %681 = vmatpush1.bf16.msra.mxu0 %v639
    %682 = vmatprep.subr.bf16.mxu0 0
    %683 = vmatpush1.bf16.msra.mxu0 %v638
    %684 = vmatprep.subr.bf16.mxu0 0
    %685 = vmatpush1.bf16.msra.mxu0 %v637
    %686 = vmatprep.subr.bf16.mxu0 0
    %687 = vmatpush1.bf16.msra.mxu0 %v636
    %688 = vmatprep.subr.bf16.mxu0 0
    %689 = vmatpush1.bf16.msra.mxu0 %v635
    %690 = vmatprep.subr.bf16.mxu0 0
    %691 = vmatpush1.bf16.msra.mxu0 %v634
    %692 = vmatprep.subr.bf16.mxu0 0
    %693 = vmatpush1.bf16.msra.mxu0 %v633
    %694 = vmatprep.subr.bf16.mxu0 0
    %695 = vmatpush1.bf16.msra.mxu0 %v632
    %696 = vmatprep.subr.bf16.mxu0 0
    %697 = vmatpush2.bf16.msra.mxu0 %v647
    %698 = vmatprep.subr.bf16.mxu0 0
    %699 = vmatpush2.bf16.msra.mxu0 %v646
    %700 = vmatprep.subr.bf16.mxu0 0
    %701 = vmatpush2.bf16.msra.mxu0 %v645
    %702 = vmatprep.subr.bf16.mxu0 0
    %703 = vmatpush2.bf16.msra.mxu0 %v644
    %704 = vmatprep.subr.bf16.mxu0 0
    %705 = vmatpush2.bf16.msra.mxu0 %v643
    %706 = vmatprep.subr.bf16.mxu0 0
    %707 = vmatpush2.bf16.msra.mxu0 %v642
    %708 = vmatprep.subr.bf16.mxu0 0
    %709 = vmatpush2.bf16.msra.mxu0 %v641
    %710 = vmatprep.subr.bf16.mxu0 0
    %711 = vmatpush2.bf16.msra.mxu0 %v640
    %712 = vmatprep.mubr.bf16.mxu0 %v479
    %713 = vmatmul.mubr.bf16.gmra.mxu0 %v478
    %v714 = vpop.f32.mrf.mxu0
    %v715 = vadd.f32 %v534, %v714
    %v716 = vpop.f32.mrf.mxu0
    %v717 = vpop.f32.mrf.mxu0
    %v718 = vadd.f32 %v534, %v717
    %v719 = vpop.f32.mrf.mxu0
    %720 = vdwg.mxu0
    %721 = vmatprep.subr.bf16.mxu0 0
    %722 = vmatpush1.bf16.msra.mxu0 %v655
    %723 = vmatprep.subr.bf16.mxu0 0
    %724 = vmatpush1.bf16.msra.mxu0 %v654
    %725 = vmatprep.subr.bf16.mxu0 0
    %726 = vmatpush1.bf16.msra.mxu0 %v653
    %727 = vmatprep.subr.bf16.mxu0 0
    %728 = vmatpush1.bf16.msra.mxu0 %v652
    %729 = vmatprep.subr.bf16.mxu0 0
    %730 = vmatpush1.bf16.msra.mxu0 %v651
    %731 = vmatprep.subr.bf16.mxu0 0
    %732 = vmatpush1.bf16.msra.mxu0 %v650
    %733 = vmatprep.subr.bf16.mxu0 0
    %734 = vmatpush1.bf16.msra.mxu0 %v649
    %735 = vmatprep.subr.bf16.mxu0 0
    %736 = vmatpush1.bf16.msra.mxu0 %v648
    %737 = vmatprep.subr.bf16.mxu0 0
    %738 = vmatpush2.bf16.msra.mxu0 0
    %739 = vmatprep.subr.bf16.mxu0 0
    %740 = vmatpush2.bf16.msra.mxu0 0
    %741 = vmatprep.subr.bf16.mxu0 0
    %742 = vmatpush2.bf16.msra.mxu0 0
    %743 = vmatprep.subr.bf16.mxu0 0
    %744 = vmatpush2.bf16.msra.mxu0 0
    %745 = vmatprep.subr.bf16.mxu0 0
    %746 = vmatpush2.bf16.msra.mxu0 0
    %747 = vmatprep.subr.bf16.mxu0 0
    %748 = vmatpush2.bf16.msra.mxu0 0
    %749 = vmatprep.subr.bf16.mxu0 0
    %750 = vmatpush2.bf16.msra.mxu0 0
    %751 = vmatprep.subr.bf16.mxu0 0
    %752 = vmatpush2.bf16.msra.mxu0 0
    %753 = vmatprep.mubr.bf16.mxu0 0
    %754 = vmatmul.mubr.bf16.gmra.mxu0 %v480
    %v755 = vpop.f32.mrf.mxu0
    %v756 = vadd.f32 %v715, %v755
    %v757 = vpop.f32.mrf.mxu0
    %v758 = vpop.f32.mrf.mxu0
    %v759 = vadd.f32 %v718, %v758
    %v760 = vpop.f32.mrf.mxu0
    %761 = vdwg.mxu0
    %v762 = vmax.f32 %v756, 0.0
    %v763 = vmax.f32 %v759, 0.0
    %v764 = vrot.slane %v762, 7
    %v765 = vrot.slane %v763, 7
    %v766 = vsel %vm168, %v764, %v765
    %v767 = vsel %vm168, %v765, %v764
    %v768 = vmul.f32 %v767, %v158
    %v769 = vmul.f32 %v766, %v159
    %v770 = vrot.slane %v762, 1
    %v771 = vrot.slane %v763, 1
    %v772 = vsel %vm175, %v770, %v771
    %v773 = vsel %vm175, %v771, %v770
    %v774 = vmul.f32 %v772, %v164
    %v775 = vmul.f32 %v773, %v165
    %v776 = vpack.c.bf16 %v769, %v768
    %v777 = vpack.c.bf16 %v763, %v762
    %v778 = vpack.c.bf16 %v775, %v774
    %v779 = vld [vmem:[#allocation8] sm:$0xf]
    %v780 = vld [vmem:[#allocation8 + $0x4] sm:$0xf]
    %v781 = vld [vmem:[#allocation8 + $0x8] sm:$0xf]
    %v782 = vld [vmem:[#allocation8 + $0xc] sm:$0xf]
    %v783 = vld [vmem:[#allocation8 + $0x10] sm:$0xf]
    %v784 = vld [vmem:[#allocation8 + $0x14] sm:$0xf]
    %v785 = vld [vmem:[#allocation8 + $0x18] sm:$0xf]
    %v786 = vld [vmem:[#allocation8 + $0x1c] sm:$0xf]
    %v787 = vld [vmem:[#allocation8 + $0x20] sm:$0xf]
    %v788 = vld [vmem:[#allocation8 + $0x24] sm:$0xf]
    %v789 = vld [vmem:[#allocation8 + $0x28] sm:$0xf]
    %v790 = vld [vmem:[#allocation8 + $0x2c] sm:$0xf]
    %v791 = vld [vmem:[#allocation8 + $0x30] sm:$0xf]
    %v792 = vld [vmem:[#allocation8 + $0x34] sm:$0xf]
    %v793 = vld [vmem:[#allocation8 + $0x38] sm:$0xf]
    %v794 = vld [vmem:[#allocation8 + $0x3c] sm:$0xf]
    %v795 = vld [vmem:[#allocation8 + $0x40] sm:$0xf]
    %v796 = vld [vmem:[#allocation8 + $0x44] sm:$0xf]
    %v797 = vld [vmem:[#allocation8 + $0x48] sm:$0xf]
    %v798 = vld [vmem:[#allocation8 + $0x4c] sm:$0xf]
    %v799 = vld [vmem:[#allocation8 + $0x50] sm:$0xf]
    %v800 = vld [vmem:[#allocation8 + $0x54] sm:$0xf]
    %v801 = vld [vmem:[#allocation8 + $0x58] sm:$0xf]
    %v802 = vld [vmem:[#allocation8 + $0x5c] sm:$0xf]
    %v803 = vld [vmem:[#allocation8 + $0x60] sm:$0xf]
    %v804 = vld [vmem:[#allocation8 + $0x64] sm:$0xf]
    %v805 = vld [vmem:[#allocation8 + $0x68] sm:$0xf]
    %v806 = vld [vmem:[#allocation8 + $0x6c] sm:$0xf]
    %v807 = vld [vmem:[#allocation8 + $0x70] sm:$0xf]
    %v808 = vld [vmem:[#allocation8 + $0x74] sm:$0xf]
    %v809 = vld [vmem:[#allocation8 + $0x78] sm:$0xf]
    %v810 = vld [vmem:[#allocation8 + $0x7c] sm:$0xf]
    %v811 = vld [vmem:[#allocation8 + $0x80] sm:$0xf]
    %v812 = vld [vmem:[#allocation8 + $0x84] sm:$0xf]
    %v813 = vld [vmem:[#allocation8 + $0x88] sm:$0xf]
    %v814 = vld [vmem:[#allocation8 + $0x8c] sm:$0xf]
    %v815 = vld [vmem:[#allocation8 + $0x90] sm:$0xf]
    %v816 = vld [vmem:[#allocation8 + $0x94] sm:$0xf]
    %v817 = vld [vmem:[#allocation8 + $0x98] sm:$0xf]
    %v818 = vld [vmem:[#allocation8 + $0x9c] sm:$0xf]
    %v819 = vld [vmem:[#allocation8 + $0xa0] sm:$0xf]
    %v820 = vld [vmem:[#allocation8 + $0xa4] sm:$0xf]
    %v821 = vld [vmem:[#allocation8 + $0xa8] sm:$0xf]
    %v822 = vld [vmem:[#allocation8 + $0xac] sm:$0xf]
    %v823 = vld [vmem:[#allocation8 + $0xb0] sm:$0xf]
    %v824 = vld [vmem:[#allocation8 + $0xb4] sm:$0xf]
    %v825 = vld [vmem:[#allocation8 + $0xb8] sm:$0xf]
    %v826 = vld [vmem:[#allocation8 + $0xbc] sm:$0xf]
    %v827 = vld [vmem:[%s6] sm:$0x1]
    %v829 = vlaneseq
    %v830 = vshrl.u32 %v829, 7
    %v831 = vsub.s32 0, %v830
    %v832 = vrot.slane %v827, %v831
    %v882 = vunpack.c.l.b16 %v779
    %v883 = vunpack.c.l.b16 %v780
    %v884 = vunpack.c.l.b16 %v781
    %v885 = vunpack.c.l.b16 %v782
    %v886 = vunpack.c.l.b16 %v783
    %v887 = vunpack.c.l.b16 %v784
    %v888 = vunpack.c.l.b16 %v785
    %v889 = vunpack.c.l.b16 %v786
    %v890 = vunpack.c.l.b16 %v787
    %v891 = vunpack.c.l.b16 %v788
    %v892 = vunpack.c.l.b16 %v789
    %v893 = vunpack.c.l.b16 %v790
    %v894 = vunpack.c.l.b16 %v791
    %v895 = vunpack.c.l.b16 %v792
    %v896 = vunpack.c.l.b16 %v793
    %v897 = vunpack.c.l.b16 %v794
    %v898 = vunpack.c.l.b16 %v795
    %v899 = vunpack.c.l.b16 %v796
    %v900 = vunpack.c.l.b16 %v797
    %v901 = vunpack.c.l.b16 %v798
    %v902 = vunpack.c.l.b16 %v799
    %v903 = vunpack.c.l.b16 %v800
    %v904 = vunpack.c.l.b16 %v801
    %v905 = vunpack.c.l.b16 %v802
    %v906 = vunpack.c.l.b16 %v803
    %v907 = vunpack.c.l.b16 %v804
    %v908 = vunpack.c.l.b16 %v805
    %v909 = vunpack.c.l.b16 %v806
    %v910 = vunpack.c.l.b16 %v807
    %v911 = vunpack.c.l.b16 %v808
    %v912 = vunpack.c.l.b16 %v809
    %v913 = vunpack.c.l.b16 %v810
    %v914 = vunpack.c.l.b16 %v811
    %v915 = vunpack.c.l.b16 %v812
    %v916 = vunpack.c.l.b16 %v813
    %v917 = vunpack.c.l.b16 %v814
    %v918 = vunpack.c.l.b16 %v815
    %v919 = vunpack.c.l.b16 %v816
    %v920 = vunpack.c.l.b16 %v817
    %v921 = vunpack.c.l.b16 %v818
    %v922 = vunpack.c.l.b16 %v819
    %v923 = vunpack.c.l.b16 %v820
    %v924 = vunpack.c.l.b16 %v821
    %v925 = vunpack.c.l.b16 %v822
    %v926 = vunpack.c.l.b16 %v823
    %v927 = vunpack.c.l.b16 %v824
    %v928 = vunpack.c.l.b16 %v825
    %v929 = vunpack.c.l.b16 %v826
    %v930 = vpack.c.b16 %v883, %v882
    %v931 = vpack.c.b16 %v885, %v884
    %v932 = vpack.c.b16 %v887, %v886
    %v933 = vpack.c.b16 %v889, %v888
    %v934 = vpack.c.b16 %v891, %v890
    %v935 = vpack.c.b16 %v893, %v892
    %v936 = vpack.c.b16 %v895, %v894
    %v937 = vpack.c.b16 %v897, %v896
    %v938 = vpack.c.b16 %v899, %v898
    %v939 = vpack.c.b16 %v901, %v900
    %v940 = vpack.c.b16 %v903, %v902
    %v941 = vpack.c.b16 %v905, %v904
    %v942 = vpack.c.b16 %v907, %v906
    %v943 = vpack.c.b16 %v909, %v908
    %v944 = vpack.c.b16 %v911, %v910
    %v945 = vpack.c.b16 %v913, %v912
    %v946 = vpack.c.b16 %v915, %v914
    %v947 = vpack.c.b16 %v917, %v916
    %v948 = vpack.c.b16 %v919, %v918
    %v949 = vpack.c.b16 %v921, %v920
    %v950 = vpack.c.b16 %v923, %v922
    %v951 = vpack.c.b16 %v925, %v924
    %v952 = vpack.c.b16 %v927, %v926
    %v953 = vpack.c.b16 %v929, %v928
    %978 = vmatprep.subr.bf16.mxu0 0
    %979 = vmatpush1.bf16.msra.mxu0 %v937
    %980 = vmatprep.subr.bf16.mxu0 0
    %981 = vmatpush1.bf16.msra.mxu0 %v936
    %982 = vmatprep.subr.bf16.mxu0 0
    %983 = vmatpush1.bf16.msra.mxu0 %v935
    %984 = vmatprep.subr.bf16.mxu0 0
    %985 = vmatpush1.bf16.msra.mxu0 %v934
    %986 = vmatprep.subr.bf16.mxu0 0
    %987 = vmatpush1.bf16.msra.mxu0 %v933
    %988 = vmatprep.subr.bf16.mxu0 0
    %989 = vmatpush1.bf16.msra.mxu0 %v932
    %990 = vmatprep.subr.bf16.mxu0 0
    %991 = vmatpush1.bf16.msra.mxu0 %v931
    %992 = vmatprep.subr.bf16.mxu0 0
    %993 = vmatpush1.bf16.msra.mxu0 %v930
    %994 = vmatprep.subr.bf16.mxu0 0
    %995 = vmatpush2.bf16.msra.mxu0 %v945
    %996 = vmatprep.subr.bf16.mxu0 0
    %997 = vmatpush2.bf16.msra.mxu0 %v944
    %998 = vmatprep.subr.bf16.mxu0 0
    %999 = vmatpush2.bf16.msra.mxu0 %v943
    %1000 = vmatprep.subr.bf16.mxu0 0
    %1001 = vmatpush2.bf16.msra.mxu0 %v942
    %1002 = vmatprep.subr.bf16.mxu0 0
    %1003 = vmatpush2.bf16.msra.mxu0 %v941
    %1004 = vmatprep.subr.bf16.mxu0 0
    %1005 = vmatpush2.bf16.msra.mxu0 %v940
    %1006 = vmatprep.subr.bf16.mxu0 0
    %1007 = vmatpush2.bf16.msra.mxu0 %v939
    %1008 = vmatprep.subr.bf16.mxu0 0
    %1009 = vmatpush2.bf16.msra.mxu0 %v938
    %1010 = vmatprep.mubr.bf16.mxu0 %v777
    %1011 = vmatmul.mubr.bf16.gmra.mxu0 %v776
    %v1012 = vpop.f32.mrf.mxu0
    %v1013 = vadd.f32 %v832, %v1012
    %v1014 = vpop.f32.mrf.mxu0
    %v1015 = vpop.f32.mrf.mxu0
    %v1016 = vadd.f32 %v832, %v1015
    %v1017 = vpop.f32.mrf.mxu0
    %1018 = vdwg.mxu0
    %1019 = vmatprep.subr.bf16.mxu0 0
    %1020 = vmatpush1.bf16.msra.mxu0 %v953
    %1021 = vmatprep.subr.bf16.mxu0 0
    %1022 = vmatpush1.bf16.msra.mxu0 %v952
    %1023 = vmatprep.subr.bf16.mxu0 0
    %1024 = vmatpush1.bf16.msra.mxu0 %v951
    %1025 = vmatprep.subr.bf16.mxu0 0
    %1026 = vmatpush1.bf16.msra.mxu0 %v950
    %1027 = vmatprep.subr.bf16.mxu0 0
    %1028 = vmatpush1.bf16.msra.mxu0 %v949
    %1029 = vmatprep.subr.bf16.mxu0 0
    %1030 = vmatpush1.bf16.msra.mxu0 %v948
    %1031 = vmatprep.subr.bf16.mxu0 0
    %1032 = vmatpush1.bf16.msra.mxu0 %v947
    %1033 = vmatprep.subr.bf16.mxu0 0
    %1034 = vmatpush1.bf16.msra.mxu0 %v946
    %1035 = vmatprep.subr.bf16.mxu0 0
    %1036 = vmatpush2.bf16.msra.mxu0 0
    %1037 = vmatprep.subr.bf16.mxu0 0
    %1038 = vmatpush2.bf16.msra.mxu0 0
    %1039 = vmatprep.subr.bf16.mxu0 0
    %1040 = vmatpush2.bf16.msra.mxu0 0
    %1041 = vmatprep.subr.bf16.mxu0 0
    %1042 = vmatpush2.bf16.msra.mxu0 0
    %1043 = vmatprep.subr.bf16.mxu0 0
    %1044 = vmatpush2.bf16.msra.mxu0 0
    %1045 = vmatprep.subr.bf16.mxu0 0
    %1046 = vmatpush2.bf16.msra.mxu0 0
    %1047 = vmatprep.subr.bf16.mxu0 0
    %1048 = vmatpush2.bf16.msra.mxu0 0
    %1049 = vmatprep.subr.bf16.mxu0 0
    %1050 = vmatpush2.bf16.msra.mxu0 0
    %1051 = vmatprep.mubr.bf16.mxu0 0
    %1052 = vmatmul.mubr.bf16.gmra.mxu0 %v778
    %v1053 = vpop.f32.mrf.mxu0
    %v1054 = vadd.f32 %v1013, %v1053
    %v1055 = vpop.f32.mrf.mxu0
    %v1056 = vpop.f32.mrf.mxu0
    %v1057 = vadd.f32 %v1016, %v1056
    %v1058 = vpop.f32.mrf.mxu0
    %1059 = vdwg.mxu0
    %v1060 = vmax.f32 %v1054, 0.0
    %v1061 = vmax.f32 %v1057, 0.0
    %v1062 = vrot.slane %v1060, 7
    %v1063 = vrot.slane %v1061, 7
    %v1064 = vsel %vm168, %v1062, %v1063
    %v1065 = vsel %vm168, %v1063, %v1062
    %v1066 = vmul.f32 %v1065, %v158
    %v1067 = vmul.f32 %v1064, %v159
    %v1068 = vrot.slane %v1060, 1
    %v1069 = vrot.slane %v1061, 1
    %v1070 = vsel %vm175, %v1068, %v1069
    %v1071 = vsel %vm175, %v1069, %v1068
    %v1072 = vmul.f32 %v1070, %v164
    %v1073 = vmul.f32 %v1071, %v165
    %v1074 = vpack.c.bf16 %v1067, %v1066
    %v1075 = vpack.c.bf16 %v1061, %v1060
    %v1076 = vpack.c.bf16 %v1073, %v1072
    %v1077 = vld [vmem:[#allocation10] sm:$0xf]
    %v1078 = vld [vmem:[#allocation10 + $0x4] sm:$0xf]
    %v1079 = vld [vmem:[#allocation10 + $0x8] sm:$0xf]
    %v1080 = vld [vmem:[#allocation10 + $0xc] sm:$0xf]
    %v1081 = vld [vmem:[#allocation10 + $0x10] sm:$0xf]
    %v1082 = vld [vmem:[#allocation10 + $0x14] sm:$0xf]
    %v1083 = vld [vmem:[#allocation10 + $0x18] sm:$0xf]
    %v1084 = vld [vmem:[#allocation10 + $0x1c] sm:$0xf]
    %v1085 = vld [vmem:[#allocation10 + $0x20] sm:$0xf]
    %v1086 = vld [vmem:[#allocation10 + $0x24] sm:$0xf]
    %v1087 = vld [vmem:[#allocation10 + $0x28] sm:$0xf]
    %v1088 = vld [vmem:[#allocation10 + $0x2c] sm:$0xf]
    %v1089 = vld [vmem:[#allocation10 + $0x30] sm:$0xf]
    %v1090 = vld [vmem:[#allocation10 + $0x34] sm:$0xf]
    %v1091 = vld [vmem:[#allocation10 + $0x38] sm:$0xf]
    %v1092 = vld [vmem:[#allocation10 + $0x3c] sm:$0xf]
    %v1093 = vld [vmem:[#allocation10 + $0x40] sm:$0xf]
    %v1094 = vld [vmem:[#allocation10 + $0x44] sm:$0xf]
    %v1095 = vld [vmem:[#allocation10 + $0x48] sm:$0xf]
    %v1096 = vld [vmem:[#allocation10 + $0x4c] sm:$0xf]
    %v1097 = vld [vmem:[#allocation10 + $0x50] sm:$0xf]
    %v1098 = vld [vmem:[#allocation10 + $0x54] sm:$0xf]
    %v1099 = vld [vmem:[#allocation10 + $0x58] sm:$0xf]
    %v1100 = vld [vmem:[#allocation10 + $0x5c] sm:$0xf]
    %v1101 = vld [vmem:[#allocation10 + $0x60] sm:$0xf]
    %v1102 = vld [vmem:[#allocation10 + $0x64] sm:$0xf]
    %v1103 = vld [vmem:[#allocation10 + $0x68] sm:$0xf]
    %v1104 = vld [vmem:[#allocation10 + $0x6c] sm:$0xf]
    %v1105 = vld [vmem:[#allocation10 + $0x70] sm:$0xf]
    %v1106 = vld [vmem:[#allocation10 + $0x74] sm:$0xf]
    %v1107 = vld [vmem:[#allocation10 + $0x78] sm:$0xf]
    %v1108 = vld [vmem:[#allocation10 + $0x7c] sm:$0xf]
    %v1109 = vld [vmem:[#allocation10 + $0x80] sm:$0xf]
    %v1110 = vld [vmem:[#allocation10 + $0x84] sm:$0xf]
    %v1111 = vld [vmem:[#allocation10 + $0x88] sm:$0xf]
    %v1112 = vld [vmem:[#allocation10 + $0x8c] sm:$0xf]
    %v1113 = vld [vmem:[#allocation10 + $0x90] sm:$0xf]
    %v1114 = vld [vmem:[#allocation10 + $0x94] sm:$0xf]
    %v1115 = vld [vmem:[#allocation10 + $0x98] sm:$0xf]
    %v1116 = vld [vmem:[#allocation10 + $0x9c] sm:$0xf]
    %v1117 = vld [vmem:[#allocation10 + $0xa0] sm:$0xf]
    %v1118 = vld [vmem:[#allocation10 + $0xa4] sm:$0xf]
    %v1119 = vld [vmem:[#allocation10 + $0xa8] sm:$0xf]
    %v1120 = vld [vmem:[#allocation10 + $0xac] sm:$0xf]
    %v1121 = vld [vmem:[#allocation10 + $0xb0] sm:$0xf]
    %v1122 = vld [vmem:[#allocation10 + $0xb4] sm:$0xf]
    %v1123 = vld [vmem:[#allocation10 + $0xb8] sm:$0xf]
    %v1124 = vld [vmem:[#allocation10 + $0xbc] sm:$0xf]
    %v1125 = vld [vmem:[%s8] sm:$0x1]
    %v1127 = vlaneseq
    %v1128 = vshrl.u32 %v1127, 7
    %v1129 = vsub.s32 0, %v1128
    %v1130 = vrot.slane %v1125, %v1129
    %v1180 = vunpack.c.l.b16 %v1077
    %v1181 = vunpack.c.l.b16 %v1078
    %v1182 = vunpack.c.l.b16 %v1079
    %v1183 = vunpack.c.l.b16 %v1080
    %v1184 = vunpack.c.l.b16 %v1081
    %v1185 = vunpack.c.l.b16 %v1082
    %v1186 = vunpack.c.l.b16 %v1083
    %v1187 = vunpack.c.l.b16 %v1084
    %v1188 = vunpack.c.l.b16 %v1085
    %v1189 = vunpack.c.l.b16 %v1086
    %v1190 = vunpack.c.l.b16 %v1087
    %v1191 = vunpack.c.l.b16 %v1088
    %v1192 = vunpack.c.l.b16 %v1089
    %v1193 = vunpack.c.l.b16 %v1090
    %v1194 = vunpack.c.l.b16 %v1091
    %v1195 = vunpack.c.l.b16 %v1092
    %v1196 = vunpack.c.l.b16 %v1093
    %v1197 = vunpack.c.l.b16 %v1094
    %v1198 = vunpack.c.l.b16 %v1095
    %v1199 = vunpack.c.l.b16 %v1096
    %v1200 = vunpack.c.l.b16 %v1097
    %v1201 = vunpack.c.l.b16 %v1098
    %v1202 = vunpack.c.l.b16 %v1099
    %v1203 = vunpack.c.l.b16 %v1100
    %v1204 = vunpack.c.l.b16 %v1101
    %v1205 = vunpack.c.l.b16 %v1102
    %v1206 = vunpack.c.l.b16 %v1103
    %v1207 = vunpack.c.l.b16 %v1104
    %v1208 = vunpack.c.l.b16 %v1105
    %v1209 = vunpack.c.l.b16 %v1106
    %v1210 = vunpack.c.l.b16 %v1107
    %v1211 = vunpack.c.l.b16 %v1108
    %v1212 = vunpack.c.l.b16 %v1109
    %v1213 = vunpack.c.l.b16 %v1110
    %v1214 = vunpack.c.l.b16 %v1111
    %v1215 = vunpack.c.l.b16 %v1112
    %v1216 = vunpack.c.l.b16 %v1113
    %v1217 = vunpack.c.l.b16 %v1114
    %v1218 = vunpack.c.l.b16 %v1115
    %v1219 = vunpack.c.l.b16 %v1116
    %v1220 = vunpack.c.l.b16 %v1117
    %v1221 = vunpack.c.l.b16 %v1118
    %v1222 = vunpack.c.l.b16 %v1119
    %v1223 = vunpack.c.l.b16 %v1120
    %v1224 = vunpack.c.l.b16 %v1121
    %v1225 = vunpack.c.l.b16 %v1122
    %v1226 = vunpack.c.l.b16 %v1123
    %v1227 = vunpack.c.l.b16 %v1124
    %v1228 = vpack.c.b16 %v1181, %v1180
    %v1229 = vpack.c.b16 %v1183, %v1182
    %v1230 = vpack.c.b16 %v1185, %v1184
    %v1231 = vpack.c.b16 %v1187, %v1186
    %v1232 = vpack.c.b16 %v1189, %v1188
    %v1233 = vpack.c.b16 %v1191, %v1190
    %v1234 = vpack.c.b16 %v1193, %v1192
    %v1235 = vpack.c.b16 %v1195, %v1194
    %v1236 = vpack.c.b16 %v1197, %v1196
    %v1237 = vpack.c.b16 %v1199, %v1198
    %v1238 = vpack.c.b16 %v1201, %v1200
    %v1239 = vpack.c.b16 %v1203, %v1202
    %v1240 = vpack.c.b16 %v1205, %v1204
    %v1241 = vpack.c.b16 %v1207, %v1206
    %v1242 = vpack.c.b16 %v1209, %v1208
    %v1243 = vpack.c.b16 %v1211, %v1210
    %v1244 = vpack.c.b16 %v1213, %v1212
    %v1245 = vpack.c.b16 %v1215, %v1214
    %v1246 = vpack.c.b16 %v1217, %v1216
    %v1247 = vpack.c.b16 %v1219, %v1218
    %v1248 = vpack.c.b16 %v1221, %v1220
    %v1249 = vpack.c.b16 %v1223, %v1222
    %v1250 = vpack.c.b16 %v1225, %v1224
    %v1251 = vpack.c.b16 %v1227, %v1226
    %1276 = vmatprep.subr.bf16.mxu0 0
    %1277 = vmatpush1.bf16.msra.mxu0 %v1235
    %1278 = vmatprep.subr.bf16.mxu0 0
    %1279 = vmatpush1.bf16.msra.mxu0 %v1234
    %1280 = vmatprep.subr.bf16.mxu0 0
    %1281 = vmatpush1.bf16.msra.mxu0 %v1233
    %1282 = vmatprep.subr.bf16.mxu0 0
    %1283 = vmatpush1.bf16.msra.mxu0 %v1232
    %1284 = vmatprep.subr.bf16.mxu0 0
    %1285 = vmatpush1.bf16.msra.mxu0 %v1231
    %1286 = vmatprep.subr.bf16.mxu0 0
    %1287 = vmatpush1.bf16.msra.mxu0 %v1230
    %1288 = vmatprep.subr.bf16.mxu0 0
    %1289 = vmatpush1.bf16.msra.mxu0 %v1229
    %1290 = vmatprep.subr.bf16.mxu0 0
    %1291 = vmatpush1.bf16.msra.mxu0 %v1228
    %1292 = vmatprep.subr.bf16.mxu0 0
    %1293 = vmatpush2.bf16.msra.mxu0 %v1243
    %1294 = vmatprep.subr.bf16.mxu0 0
    %1295 = vmatpush2.bf16.msra.mxu0 %v1242
    %1296 = vmatprep.subr.bf16.mxu0 0
    %1297 = vmatpush2.bf16.msra.mxu0 %v1241
    %1298 = vmatprep.subr.bf16.mxu0 0
    %1299 = vmatpush2.bf16.msra.mxu0 %v1240
    %1300 = vmatprep.subr.bf16.mxu0 0
    %1301 = vmatpush2.bf16.msra.mxu0 %v1239
    %1302 = vmatprep.subr.bf16.mxu0 0
    %1303 = vmatpush2.bf16.msra.mxu0 %v1238
    %1304 = vmatprep.subr.bf16.mxu0 0
    %1305 = vmatpush2.bf16.msra.mxu0 %v1237
    %1306 = vmatprep.subr.bf16.mxu0 0
    %1307 = vmatpush2.bf16.msra.mxu0 %v1236
    %1308 = vmatprep.mubr.bf16.mxu0 %v1075
    %1309 = vmatmul.mubr.bf16.gmra.mxu0 %v1074
    %v1310 = vpop.f32.mrf.mxu0
    %v1311 = vadd.f32 %v1130, %v1310
    %v1312 = vpop.f32.mrf.mxu0
    %v1313 = vpop.f32.mrf.mxu0
    %v1314 = vadd.f32 %v1130, %v1313
    %v1315 = vpop.f32.mrf.mxu0
    %1316 = vdwg.mxu0
    %1317 = vmatprep.subr.bf16.mxu0 0
    %1318 = vmatpush1.bf16.msra.mxu0 %v1251
    %1319 = vmatprep.subr.bf16.mxu0 0
    %1320 = vmatpush1.bf16.msra.mxu0 %v1250
    %1321 = vmatprep.subr.bf16.mxu0 0
    %1322 = vmatpush1.bf16.msra.mxu0 %v1249
    %1323 = vmatprep.subr.bf16.mxu0 0
    %1324 = vmatpush1.bf16.msra.mxu0 %v1248
    %1325 = vmatprep.subr.bf16.mxu0 0
    %1326 = vmatpush1.bf16.msra.mxu0 %v1247
    %1327 = vmatprep.subr.bf16.mxu0 0
    %1328 = vmatpush1.bf16.msra.mxu0 %v1246
    %1329 = vmatprep.subr.bf16.mxu0 0
    %1330 = vmatpush1.bf16.msra.mxu0 %v1245
    %1331 = vmatprep.subr.bf16.mxu0 0
    %1332 = vmatpush1.bf16.msra.mxu0 %v1244
    %1333 = vmatprep.subr.bf16.mxu0 0
    %1334 = vmatpush2.bf16.msra.mxu0 0
    %1335 = vmatprep.subr.bf16.mxu0 0
    %1336 = vmatpush2.bf16.msra.mxu0 0
    %1337 = vmatprep.subr.bf16.mxu0 0
    %1338 = vmatpush2.bf16.msra.mxu0 0
    %1339 = vmatprep.subr.bf16.mxu0 0
    %1340 = vmatpush2.bf16.msra.mxu0 0
    %1341 = vmatprep.subr.bf16.mxu0 0
    %1342 = vmatpush2.bf16.msra.mxu0 0
    %1343 = vmatprep.subr.bf16.mxu0 0
    %1344 = vmatpush2.bf16.msra.mxu0 0
    %1345 = vmatprep.subr.bf16.mxu0 0
    %1346 = vmatpush2.bf16.msra.mxu0 0
    %1347 = vmatprep.subr.bf16.mxu0 0
    %1348 = vmatpush2.bf16.msra.mxu0 0
    %1349 = vmatprep.mubr.bf16.mxu0 0
    %1350 = vmatmul.mubr.bf16.gmra.mxu0 %v1076
    %v1351 = vpop.f32.mrf.mxu0
    %v1352 = vadd.f32 %v1311, %v1351
    %v1353 = vpop.f32.mrf.mxu0
    %v1354 = vpop.f32.mrf.mxu0
    %v1355 = vadd.f32 %v1314, %v1354
    %v1356 = vpop.f32.mrf.mxu0
    %1357 = vdwg.mxu0
    %v1358 = vmax.f32 %v1352, 0.0
    %v1359 = vmax.f32 %v1355, 0.0
    %v1360 = vrot.slane %v1358, 4
    %v1361 = vadd.f32 %v1358, %v1360
    %v1362 = vrot.slane %v1361, 2
    %v1363 = vadd.f32 %v1361, %v1362
    %v1364 = vrot.slane %v1363, 1
    %v1365 = vadd.f32 %v1363, %v1364
    %v1366 = vrot.slane %v1359, 4
    %v1367 = vadd.f32 %v1359, %v1366
    %v1368 = vrot.slane %v1367, 2
    %v1369 = vadd.f32 %v1367, %v1368
    %v1370 = vrot.slane %v1369, 1
    %v1371 = vadd.f32 %v1369, %v1370
    %v1372 = vpack.c.bf16 %v1365, %v1365
    %v1373 = vpack.c.bf16 %v1371, %v1371
    %v1374 = vld [vmem:[#allocation11] sm:$0xf]
    %v1375 = vld [vmem:[#allocation11 + $0x4] sm:$0xf]
    %v1376 = vld [vmem:[#allocation11 + $0x8] sm:$0xf]
    %v1377 = vld [vmem:[#allocation11 + $0xc] sm:$0xf]
    %v1378 = vld [vmem:[#allocation11 + $0x10] sm:$0xf]
    %v1379 = vld [vmem:[#allocation11 + $0x14] sm:$0xf]
    %v1380 = vld [vmem:[#allocation11 + $0x18] sm:$0xf]
    %v1381 = vld [vmem:[#allocation11 + $0x1c] sm:$0xf]
    %v1382 = vld [vmem:[#allocation11 + $0x20] sm:$0xf]
    %v1383 = vld [vmem:[#allocation11 + $0x24] sm:$0xf]
    %v1384 = vld [vmem:[#allocation11 + $0x28] sm:$0xf]
    %v1385 = vld [vmem:[#allocation11 + $0x2c] sm:$0xf]
    %v1386 = vld [vmem:[#allocation11 + $0x30] sm:$0xf]
    %v1387 = vld [vmem:[#allocation11 + $0x34] sm:$0xf]
    %v1388 = vld [vmem:[#allocation11 + $0x38] sm:$0xf]
    %v1389 = vld [vmem:[#allocation11 + $0x3c] sm:$0xf]
    %v1390 = vld [vmem:[%s10] sm:$0x1]
    %v1392 = vlaneseq
    %v1393 = vshrl.u32 %v1392, 7
    %v1394 = vsub.s32 0, %v1393
    %v1395 = vrot.slane %v1390, %v1394
    %v1399 = vunpack.c.l.b16 %v1372
    %v1400 = vunpack.c.l.b16 %v1373
    %vm1401 = vcmask 1041409
    %v1402 = vsel %vm1401, %v1400, %v1399
    %v1403 = vpack.c.b16 %v1402, %v1402
    %v1421 = vunpack.c.l.b16 %v1374
    %v1422 = vunpack.c.l.b16 %v1375
    %v1423 = vunpack.c.l.b16 %v1376
    %v1424 = vunpack.c.l.b16 %v1377
    %v1425 = vunpack.c.l.b16 %v1378
    %v1426 = vunpack.c.l.b16 %v1379
    %v1427 = vunpack.c.l.b16 %v1380
    %v1428 = vunpack.c.l.b16 %v1381
    %v1429 = vunpack.c.l.b16 %v1382
    %v1430 = vunpack.c.l.b16 %v1383
    %v1431 = vunpack.c.l.b16 %v1384
    %v1432 = vunpack.c.l.b16 %v1385
    %v1433 = vunpack.c.l.b16 %v1386
    %v1434 = vunpack.c.l.b16 %v1387
    %v1435 = vunpack.c.l.b16 %v1388
    %v1436 = vunpack.c.l.b16 %v1389
    %v1437 = vpack.c.b16 %v1422, %v1421
    %v1438 = vpack.c.b16 %v1424, %v1423
    %v1439 = vpack.c.b16 %v1426, %v1425
    %v1440 = vpack.c.b16 %v1428, %v1427
    %v1441 = vpack.c.b16 %v1430, %v1429
    %v1442 = vpack.c.b16 %v1432, %v1431
    %v1443 = vpack.c.b16 %v1434, %v1433
    %v1444 = vpack.c.b16 %v1436, %v1435
    %1453 = vmatprep.subr.bf16.mxu0 0
    %1454 = vmatpush1.bf16.msra.mxu0 %v1444
    %1455 = vmatprep.subr.bf16.mxu0 0
    %1456 = vmatpush1.bf16.msra.mxu0 %v1443
    %1457 = vmatprep.subr.bf16.mxu0 0
    %1458 = vmatpush1.bf16.msra.mxu0 %v1442
    %1459 = vmatprep.subr.bf16.mxu0 0
    %1460 = vmatpush1.bf16.msra.mxu0 %v1441
    %1461 = vmatprep.subr.bf16.mxu0 0
    %1462 = vmatpush1.bf16.msra.mxu0 %v1440
    %1463 = vmatprep.subr.bf16.mxu0 0
    %1464 = vmatpush1.bf16.msra.mxu0 %v1439
    %1465 = vmatprep.subr.bf16.mxu0 0
    %1466 = vmatpush1.bf16.msra.mxu0 %v1438
    %1467 = vmatprep.subr.bf16.mxu0 0
    %1468 = vmatpush1.bf16.msra.mxu0 %v1437
    %1469 = vmatprep.subr.bf16.mxu0 0
    %1470 = vmatpush2.bf16.msra.mxu0 0
    %1471 = vmatprep.subr.bf16.mxu0 0
    %1472 = vmatpush2.bf16.msra.mxu0 0
    %1473 = vmatprep.subr.bf16.mxu0 0
    %1474 = vmatpush2.bf16.msra.mxu0 0
    %1475 = vmatprep.subr.bf16.mxu0 0
    %1476 = vmatpush2.bf16.msra.mxu0 0
    %1477 = vmatprep.subr.bf16.mxu0 0
    %1478 = vmatpush2.bf16.msra.mxu0 0
    %1479 = vmatprep.subr.bf16.mxu0 0
    %1480 = vmatpush2.bf16.msra.mxu0 0
    %1481 = vmatprep.subr.bf16.mxu0 0
    %1482 = vmatpush2.bf16.msra.mxu0 0
    %1483 = vmatprep.subr.bf16.mxu0 0
    %1484 = vmatpush2.bf16.msra.mxu0 0
    %1485 = vmatprep.mubr.bf16.mxu0 0
    %1486 = vmatmul.mubr.bf16.gmra.mxu0 %v1403
    %v1487 = vpop.f32.mrf.mxu0
    %v1488 = vadd.f32 %v1395, %v1487
    %v1489 = vpop.f32.mrf.mxu0
    %v1490 = vpop.f32.mrf.mxu0
    %v1491 = vpop.f32.mrf.mxu0
    %1492 = vdwg.mxu0
    %1493 = vst [vmem:[#allocation13] sm:$0x3] %v1488
    // Predicated region
    $region70: #{tpu_custom_call.1} parent=1 // pred_check
      _
    $region71: #{tpu_custom_call.1} parent=1 // pred_check_branch
      %1495 = sbr.rel (0) target = $region73
    $region72: #{tpu_custom_call.1} parent=1 // pred_region
      %s1497 = ssub.s32 32, 32
      %1498 = vsyncadd [#allocation4], %s1497
      %s1500 = sshll.u32 [#allocation13], 4
      %s1501 = int_to_ptr.vmem [resolvable:$true] %s1500
      %1503 = dma.vmem_to_hbm [thread:$0]  %s1501, 32, %s11, [#allocation4]
    $region73: #{tpu_custom_call.1} parent=1 // pred_fallthru
      _
    // Predicated region
    $region74: #{tpu_custom_call.1} parent=1 // pred_check
      _
    $region75: #{tpu_custom_call.1} parent=1 // pred_check_branch
      %1505 = sbr.rel (0) target = $region77
    $region76: #{tpu_custom_call.1} parent=1 // pred_region
      %1506 = dma.done [#allocation4], 32
    $region77: #{tpu_custom_call.1} parent=1 // pred_fallthru
      _
    %1507 = vsyncpa [#allocation3], 1
    %1508 = vsyncpa [#allocation6], 1
    %1509 = vsyncpa [#allocation9], 1
    %1510 = vsyncpa [#allocation12], 1
    %1511 = vsyncpa [#allocation4], 1

</llo_original>
